<compile_context>
chip_gen: v7x
topology: tpu7x:2x2x1
jax: 0.10.0
libtpu: 0.0.40
codegen_flags: <defaults>
</compile_context>

<pallas_src>
import functools

import jax
import jax.numpy as jnp
from jax.experimental import pallas as pl
from jax.experimental.pallas import tpu as pltpu


# -----------------------------------------------------------------------------
# Kernel
# -----------------------------------------------------------------------------
def vae_forward_kernel(
    x_ref, eps_ref,
    w1_ref, b1_ref,
    w23_ref, b23_ref,
    w4_ref, b4_ref,
    w5_ref, b5_ref,
    xout_ref, mulogvar_ref,
):
    z_dim = eps_ref.shape[-1]
    cd = w1_ref.dtype                        # MXU compute dtype (bf16)

    # In-kernel cast: x streams from HBM once as f32, converted to bf16 in vregs.
    x = x_ref[...].astype(cd)                # (TB, img_size)
    eps = eps_ref[...]                       # (TB, z_dim), f32

    # ---- encode: fc1 + ReLU ----
    h = jnp.dot(x, w1_ref[...], preferred_element_type=jnp.float32) + b1_ref[...]
    h = jnp.maximum(h, 0.0)

    # ---- fused fc2|fc3: one lane-dense (h_dim, 128) matmul -> [mu | logvar | 0-pad] ----
    ml = jnp.dot(h.astype(cd), w23_ref[...], preferred_element_type=jnp.float32) + b23_ref[...]
    mu = ml[:, :z_dim]
    log_var = ml[:, z_dim:2 * z_dim]

    # ---- reparameterize: z = mu + eps * exp(log_var / 2)  (f32 elementwise, exp on EUP) ----
    z = mu + eps * jnp.exp(log_var * 0.5)

    # ---- decode: fc4 + ReLU, fc5 + sigmoid ----
    d = jnp.dot(z.astype(cd), w4_ref[...], preferred_element_type=jnp.float32) + b4_ref[...]
    d = jnp.maximum(d, 0.0)
    logits = jnp.dot(d.astype(cd), w5_ref[...], preferred_element_type=jnp.float32) + b5_ref[...]

    xout_ref[...] = jax.nn.sigmoid(logits).astype(xout_ref.dtype)
    mulogvar_ref[...] = ml                   # 128-lane, unmasked store


# -----------------------------------------------------------------------------
# Parameter packing (one-time, outside the per-call path)
# -----------------------------------------------------------------------------
def _round_up(n, m):
    return ((n + m - 1) // m) * m


def prepare_params(params, *, compute_dtype=jnp.bfloat16):
    """Pack + pre-cast VAE weights once. Returns a dict reusable across forward calls.

    params: dict with w1..w5 stored as [in_features, out_features] and b1..b5 as [1, out],
    all float32 (see init_params)."""
    z_dim = params["w2"].shape[1]
    zp = max(128, _round_up(2 * z_dim, 128))          # lane-dense packed mu|logvar width
    cd = compute_dtype

    w23 = jnp.concatenate([params["w2"], params["w3"]], axis=1)            # (h, 2z)
    b23 = jnp.concatenate([params["b2"], params["b3"]], axis=1)            # (1, 2z)
    pad = zp - 2 * z_dim
    if pad:
        w23 = jnp.pad(w23, ((0, 0), (0, pad)))
        b23 = jnp.pad(b23, ((0, 0), (0, pad)))

    return {
        "z_dim": z_dim,
        "zp": zp,
        "compute_dtype": cd,
        "w1": params["w1"].astype(cd),
        "b1": params["b1"].astype(jnp.float32),
        "w23": w23.astype(cd),
        "b23": b23.astype(jnp.float32),
        "w4": params["w4"].astype(cd),
        "b4": params["b4"].astype(jnp.float32),
        "w5": params["w5"].astype(cd),
        "b5": params["b5"].astype(jnp.float32),
    }


# -----------------------------------------------------------------------------
# Tile selection / VMEM budgeting
# -----------------------------------------------------------------------------
def _vmem_budget_bytes():
    """Generation-aware scoped-VMEM budget (v5e/v6e: 128 MiB phys, v7x: 64 MiB)."""
    cap = 64 << 20  # conservative default = v7x physical VMEM
    try:
        info = pltpu.get_tpu_info()
        cap = int(getattr(info, "vmem_capacity_bytes", cap))
    except Exception:
        pass
    # Leave headroom for compiler scratch; never ask for more than ~96 MiB (and the
    # 64 MiB v7x cap collapses this to ~48 MiB there).
    return min(cap * 3 // 4, 96 << 20)


def _vmem_estimate(tb, img, h, z, zp, cd_bytes, out_bytes):
    """Rough per-call VMEM footprint for tile size `tb`."""
    io = 2 * (tb * img * 4 + tb * z * 4 + tb * img * out_bytes + tb * zp * 4)  # dbl-buffered I/O
    wgt = (img * h + h * zp + z * h + h * img) * cd_bytes + (2 * h + zp + img) * 4
    scratch = tb * (2 * h + zp + img) * 4                                      # f32 intermediates
    return io + wgt + scratch


def _pick_batch_tile(B, vmem_fn, budget):
    """Largest MXU/VMEM-friendly batch tile; prefer >=2 grid steps with an even count."""
    cands = [2048, 1024, 512, 256, 128, 64, 32, 16]
    feas = [tb for tb in cands if B % tb == 0 and vmem_fn(tb) <= budget]
    for pred in (lambda tb: B // tb >= 2 and (B // tb) % 2 == 0,   # even steps (v7x 2 TCs)
                 lambda tb: B // tb >= 2,                          # at least pipelined
                 lambda tb: True):                                 # largest feasible
        for tb in feas:
            if pred(tb):
                return tb
    return B


# -----------------------------------------------------------------------------
# Wrapper
# -----------------------------------------------------------------------------
def vae_forward(x, eps, packed, *, batch_tile=None, out_dtype=jnp.float32):
    """Fused VAE forward on TPU.

    x:      (B, img_size) float32
    eps:    (B, z_dim)    float32  (random normal, matches torch.randn_like)
    packed: output of prepare_params (pre-cast / pre-packed weights)
    Returns (x_out, mu, log_var); mu/log_var are float32, x_out has dtype `out_dtype`.
    """
    B, img_size = x.shape
    z_dim = packed["z_dim"]
    zp = packed["zp"]
    h_dim = packed["w1"].shape[1]
    assert eps.shape == (B, z_dim)
    cd = packed["compute_dtype"]
    cd_bytes = jnp.dtype(cd).itemsize
    out_bytes = jnp.dtype(out_dtype).itemsize

    budget = _vmem_budget_bytes()
    vmem_fn = functools.partial(_vmem_estimate, img=img_size, h=h_dim, z=z_dim, zp=zp,
                                cd_bytes=cd_bytes, out_bytes=out_bytes)
    if batch_tile is None:
        batch_tile = _pick_batch_tile(B, vmem_fn, budget)
    TB = batch_tile
    assert B % TB == 0 and TB % 8 == 0, (B, TB)

    # Batch-tiled activations (new block each grid step -> double-buffered / pipelined).
    def act_spec(feat):
        return pl.BlockSpec((TB, feat), lambda i: (i, 0))

    # Grid-invariant weights/biases: same block every step -> single buffer is enough.
    def const_spec(shape):
        return pl.BlockSpec(shape, lambda i: (0, 0), pipeline_mode=pl.Buffered(1))

    in_specs = [
        act_spec(img_size),                                          # x (f32, cast in-kernel)
        act_spec(z_dim),                                             # eps
        const_spec((img_size, h_dim)), const_spec((1, h_dim)),       # fc1
        const_spec((h_dim, zp)),       const_spec((1, zp)),          # fc2|fc3 fused, 128-lane
        const_spec((z_dim, h_dim)),    const_spec((1, h_dim)),       # fc4
        const_spec((h_dim, img_size)), const_spec((1, img_size)),    # fc5
    ]
    out_specs = (
        act_spec(img_size),        # reconstructed x
        act_spec(zp),              # packed [mu | logvar | pad] -- unmasked 128-lane store
    )
    out_shape = (
        jax.ShapeDtypeStruct((B, img_size), out_dtype),
        jax.ShapeDtypeStruct((B, zp), jnp.float32),
    )

    # Advisory cost hint for XLA's scheduler.
    flops = 2 * B * (img_size * h_dim + h_dim * zp + z_dim * h_dim + h_dim * img_size)
    transcendentals = B * (z_dim + img_size)            # exp in reparam + sigmoid
    weight_bytes = (img_size * h_dim + h_dim * zp + z_dim * h_dim + h_dim * img_size) * cd_bytes
    bias_bytes = (2 * h_dim + zp + img_size) * 4
    bytes_accessed = (
        B * img_size * 4                 # x in (f32, cast in-kernel)
        + B * z_dim * 4                  # eps in
        + weight_bytes + bias_bytes
        + B * img_size * out_bytes       # x_out
        + B * zp * 4                     # packed mu|logvar
    )

    # Scoped-VMEM ask derived from the actual tile footprint (headroom, generation-safe cap).
    vmem_limit = int(min(budget, max(32 << 20, vmem_fn(TB) + (8 << 20))))

    x_out, mulogvar = pl.pallas_call(
        vae_forward_kernel,
        out_shape=out_shape,
        grid_spec=pltpu.PrefetchScalarGridSpec(
            num_scalar_prefetch=0,
            grid=(B // TB,),
            in_specs=in_specs,
            out_specs=out_specs,
        ),
        compiler_params=pltpu.CompilerParams(
            dimension_semantics=("parallel",),
            vmem_limit_bytes=vmem_limit,
        ),
        cost_estimate=pl.CostEstimate(
            flops=int(flops),
            transcendentals=int(transcendentals),
            bytes_accessed=int(bytes_accessed),
        ),
    )(x, eps, packed["w1"], packed["b1"], packed["w23"], packed["b23"],
      packed["w4"], packed["b4"], packed["w5"], packed["b5"])

    mu = mulogvar[:, :z_dim]
    log_var = mulogvar[:, z_dim:2 * z_dim]
    return x_out, mu, log_var


# -----------------------------------------------------------------------------
# Init + pure-JAX reference
# -----------------------------------------------------------------------------
def init_params(key, img_size, h_dim, z_dim):
    """Deterministic synthetic init (Kaiming-uniform-ish, like nn.Linear default)."""
    def linear(key, fan_in, fan_out):
        kw, kb = jax.random.split(key)
        bound = 1.0 / jnp.sqrt(fan_in)
        # stored already transposed: [in, out]
        w = jax.random.uniform(kw, (fan_in, fan_out), jnp.float32, -bound, bound)
        b = jax.random.uniform(kb, (1, fan_out), jnp.float32, -bound, bound)
        return w, b

    keys = jax.random.split(key, 5)
    params = {}
    params["w1"], params["b1"] = linear(keys[0], img_size, h_dim)
    params["w2"], params["b2"] = linear(keys[1], h_dim, z_dim)
    params["w3"], params["b3"] = linear(keys[2], h_dim, z_dim)
    params["w4"], params["b4"] = linear(keys[3], z_dim, h_dim)
    params["w5"], params["b5"] = linear(keys[4], h_dim, img_size)
    return params


def vae_forward_ref(x, eps, p, *, compute_dtype=jnp.float32):
    """Pure-JAX reference mirroring the PyTorch forward.

    compute_dtype controls the matmul input precision (set to bf16 to match the kernel's
    MXU input casts; accumulation is always f32)."""
    cd = compute_dtype

    def mm(a, w):
        return jnp.dot(a.astype(cd), w.astype(cd), preferred_element_type=jnp.float32)

    h = jax.nn.relu(mm(x, p["w1"]) + p["b1"])
    mu = mm(h, p["w2"]) + p["b2"]
    log_var = mm(h, p["w3"]) + p["b3"]
    z = mu + eps * jnp.exp(log_var / 2.0)
    d = jax.nn.relu(mm(z, p["w4"]) + p["b4"])
    x_out = jax.nn.sigmoid(mm(d, p["w5"]) + p["b5"])
    return x_out, mu, log_var


if __name__ == "__main__":
    # Small shapes consistent with the module: flat image input, hidden, latent.
    # B large enough for a >1-step (even) grid while staying tiny.
    B, IMG, H, Z = 512, 256, 128, 32

    key = jax.random.PRNGKey(0)
    k_x, k_eps, k_p = jax.random.split(key, 3)

    x = jax.nn.sigmoid(jax.random.normal(k_x, (B, IMG), jnp.float32))  # pixel-like inputs in (0,1)
    # eps matches torch.randn_like(std) — sampled outside the kernel for determinism.
    eps = jax.random.normal(k_eps, (B, Z), jnp.float32)
    params = init_params(k_p, IMG, H, Z)

    packed = prepare_params(params)                  # one-time pack/cast, reused across calls
    x_out, mu, log_var = vae_forward(x, eps, packed)
    jax.block_until_ready((x_out, mu, log_var))

    # Correctness vs a matched-precision (bf16 matmul inputs, f32 accumulation) reference.
    x_ref, mu_ref, lv_ref = vae_forward_ref(x, eps, params, compute_dtype=jnp.bfloat16)
    assert jnp.allclose(x_out, x_ref, atol=2e-3, rtol=2e-3)
    assert jnp.allclose(mu, mu_ref, atol=2e-3, rtol=2e-3)
    assert jnp.allclose(log_var, lv_ref, atol=2e-3, rtol=2e-3)

    # Loose sanity check against the full-f32 reference (bf16 rounding only).
    xf, muf, lvf = vae_forward_ref(x, eps, params, compute_dtype=jnp.float32)
    assert jnp.allclose(x_out, xf, atol=5e-2, rtol=5e-2)
    assert jnp.allclose(mu, muf, atol=5e-2, rtol=5e-2)
    assert jnp.allclose(log_var, lvf, atol=5e-2, rtol=5e-2)

    print("KERNEL_OK")
</pallas_src>

<mosaic_0001>
module attributes {stable_mosaic.version = 11 : i64} {
  func.func @vae_forward_kernel(%arg0: i32, %arg1: memref<256x256xf32, #tpu.memory_space<vmem>>, %arg2: memref<256x32xf32, #tpu.memory_space<vmem>>, %arg3: memref<256x128xbf16, #tpu.memory_space<vmem>>, %arg4: memref<1x128xf32, #tpu.memory_space<vmem>>, %arg5: memref<128x128xbf16, #tpu.memory_space<vmem>>, %arg6: memref<1x128xf32, #tpu.memory_space<vmem>>, %arg7: memref<32x128xbf16, #tpu.memory_space<vmem>>, %arg8: memref<1x128xf32, #tpu.memory_space<vmem>>, %arg9: memref<128x256xbf16, #tpu.memory_space<vmem>>, %arg10: memref<1x256xf32, #tpu.memory_space<vmem>>, %arg11: memref<256x256xf32, #tpu.memory_space<vmem>>, %arg12: memref<256x128xf32, #tpu.memory_space<vmem>>) attributes {dimension_semantics = [#tpu.dimension_semantics<parallel>], iteration_bounds = array<i64: 2>, scalar_prefetch = 0 : i64, scratch_operands = 0 : i64, tpu.core_type = #tpu.core_type<tc>, window_params = [{transform_indices = @transform_0, window_bounds = array<i64: 256, 256>}, {transform_indices = @transform_1, window_bounds = array<i64: 256, 32>}, {pipeline_mode = #tpu.pipeline_mode<synchronous>, transform_indices = @transform_2, window_bounds = array<i64: 256, 128>}, {pipeline_mode = #tpu.pipeline_mode<synchronous>, transform_indices = @transform_3, window_bounds = array<i64: 1, 128>}, {pipeline_mode = #tpu.pipeline_mode<synchronous>, transform_indices = @transform_4, window_bounds = array<i64: 128, 128>}, {pipeline_mode = #tpu.pipeline_mode<synchronous>, transform_indices = @transform_5, window_bounds = array<i64: 1, 128>}, {pipeline_mode = #tpu.pipeline_mode<synchronous>, transform_indices = @transform_6, window_bounds = array<i64: 32, 128>}, {pipeline_mode = #tpu.pipeline_mode<synchronous>, transform_indices = @transform_7, window_bounds = array<i64: 1, 128>}, {pipeline_mode = #tpu.pipeline_mode<synchronous>, transform_indices = @transform_8, window_bounds = array<i64: 128, 256>}, {pipeline_mode = #tpu.pipeline_mode<synchronous>, transform_indices = @transform_9, window_bounds = array<i64: 1, 256>}, {transform_indices = @transform_10, window_bounds = array<i64: 256, 256>}, {transform_indices = @transform_11, window_bounds = array<i64: 256, 128>}]} {
    %c0 = arith.constant 0 : index
    %c0_0 = arith.constant 0 : index
    %0 = vector.load %arg1[%c0, %c0_0] : memref<256x256xf32, #tpu.memory_space<vmem>>, vector<256x256xf32>
    %1 = arith.truncf %0 : vector<256x256xf32> to vector<256x256xbf16>
    %c0_1 = arith.constant 0 : index
    %c0_2 = arith.constant 0 : index
    %2 = vector.load %arg2[%c0_1, %c0_2] : memref<256x32xf32, #tpu.memory_space<vmem>>, vector<256x32xf32>
    %c0_3 = arith.constant 0 : index
    %c0_4 = arith.constant 0 : index
    %3 = vector.load %arg3[%c0_3, %c0_4] : memref<256x128xbf16, #tpu.memory_space<vmem>>, vector<256x128xbf16>
    %cst = arith.constant dense<0.000000e+00> : vector<256x128xf32>
    %4 = tpu.matmul %1, %3, %cst {dimension_numbers = #tpu.dot_dimension_numbers<[1], [0], [0], [1], [0, 0, 1, 1], [], []>} : vector<256x256xbf16>, vector<256x128xbf16>, vector<256x128xf32> -> vector<256x128xf32>
    %c0_5 = arith.constant 0 : index
    %c0_6 = arith.constant 0 : index
    %5 = vector.load %arg4[%c0_5, %c0_6] : memref<1x128xf32, #tpu.memory_space<vmem>>, vector<1x128xf32>
    %6 = vector.broadcast %5 : vector<1x128xf32> to vector<256x128xf32>
    %7 = arith.addf %4, %6 : vector<256x128xf32>
    %cst_7 = arith.constant 0.000000e+00 : f32
    %8 = vector.broadcast %cst_7 : f32 to vector<256x128xf32>
    %9 = arith.maximumf %7, %8 : vector<256x128xf32>
    %10 = arith.truncf %9 : vector<256x128xf32> to vector<256x128xbf16>
    %c0_8 = arith.constant 0 : index
    %c0_9 = arith.constant 0 : index
    %11 = vector.load %arg5[%c0_8, %c0_9] : memref<128x128xbf16, #tpu.memory_space<vmem>>, vector<128x128xbf16>
    %cst_10 = arith.constant dense<0.000000e+00> : vector<256x128xf32>
    %12 = tpu.matmul %10, %11, %cst_10 {dimension_numbers = #tpu.dot_dimension_numbers<[1], [0], [0], [1], [0, 0, 1, 1], [], []>} : vector<256x128xbf16>, vector<128x128xbf16>, vector<256x128xf32> -> vector<256x128xf32>
    %c0_11 = arith.constant 0 : index
    %c0_12 = arith.constant 0 : index
    %13 = vector.load %arg6[%c0_11, %c0_12] : memref<1x128xf32, #tpu.memory_space<vmem>>, vector<1x128xf32>
    %14 = vector.broadcast %13 : vector<1x128xf32> to vector<256x128xf32>
    %15 = arith.addf %12, %14 : vector<256x128xf32>
    %16 = vector.extract_strided_slice %15 {offsets = [0, 0], sizes = [256, 32], strides = [1, 1]} : vector<256x128xf32> to vector<256x32xf32>
    %17 = vector.extract_strided_slice %15 {offsets = [0, 32], sizes = [256, 32], strides = [1, 1]} : vector<256x128xf32> to vector<256x32xf32>
    %cst_13 = arith.constant 5.000000e-01 : f32
    %18 = vector.broadcast %cst_13 : f32 to vector<256x32xf32>
    %19 = arith.mulf %17, %18 : vector<256x32xf32>
    %20 = math.exp %19 : vector<256x32xf32>
    %21 = arith.mulf %2, %20 : vector<256x32xf32>
    %22 = arith.addf %16, %21 : vector<256x32xf32>
    %23 = arith.truncf %22 : vector<256x32xf32> to vector<256x32xbf16>
    %c0_14 = arith.constant 0 : index
    %c0_15 = arith.constant 0 : index
    %24 = vector.load %arg7[%c0_14, %c0_15] : memref<32x128xbf16, #tpu.memory_space<vmem>>, vector<32x128xbf16>
    %cst_16 = arith.constant dense<0.000000e+00> : vector<256x128xf32>
    %25 = tpu.matmul %23, %24, %cst_16 {dimension_numbers = #tpu.dot_dimension_numbers<[1], [0], [0], [1], [0, 0, 1, 1], [], []>} : vector<256x32xbf16>, vector<32x128xbf16>, vector<256x128xf32> -> vector<256x128xf32>
    %c0_17 = arith.constant 0 : index
    %c0_18 = arith.constant 0 : index
    %26 = vector.load %arg8[%c0_17, %c0_18] : memref<1x128xf32, #tpu.memory_space<vmem>>, vector<1x128xf32>
    %27 = vector.broadcast %26 : vector<1x128xf32> to vector<256x128xf32>
    %28 = arith.addf %25, %27 : vector<256x128xf32>
    %cst_19 = arith.constant 0.000000e+00 : f32
    %29 = vector.broadcast %cst_19 : f32 to vector<256x128xf32>
    %30 = arith.maximumf %28, %29 : vector<256x128xf32>
    %31 = arith.truncf %30 : vector<256x128xf32> to vector<256x128xbf16>
    %c0_20 = arith.constant 0 : index
    %c0_21 = arith.constant 0 : index
    %32 = vector.load %arg9[%c0_20, %c0_21] : memref<128x256xbf16, #tpu.memory_space<vmem>>, vector<128x256xbf16>
    %cst_22 = arith.constant dense<0.000000e+00> : vector<256x256xf32>
    %33 = tpu.matmul %31, %32, %cst_22 {dimension_numbers = #tpu.dot_dimension_numbers<[1], [0], [0], [1], [0, 0, 1, 1], [], []>} : vector<256x128xbf16>, vector<128x256xbf16>, vector<256x256xf32> -> vector<256x256xf32>
    %c0_23 = arith.constant 0 : index
    %c0_24 = arith.constant 0 : index
    %34 = vector.load %arg10[%c0_23, %c0_24] : memref<1x256xf32, #tpu.memory_space<vmem>>, vector<1x256xf32>
    %35 = vector.broadcast %34 : vector<1x256xf32> to vector<256x256xf32>
    %36 = arith.addf %33, %35 : vector<256x256xf32>
    %37 = arith.negf %36 : vector<256x256xf32>
    %38 = math.exp %37 : vector<256x256xf32>
    %cst_25 = arith.constant 1.000000e+00 : f32
    %39 = vector.broadcast %cst_25 : f32 to vector<256x256xf32>
    %40 = arith.addf %39, %38 : vector<256x256xf32>
    %41 = arith.divf %39, %40 : vector<256x256xf32>
    %c0_26 = arith.constant 0 : index
    %c0_27 = arith.constant 0 : index
    %42 = vector.load %arg11[%c0_26, %c0_27] : memref<256x256xf32, #tpu.memory_space<vmem>>, vector<256x256xf32>
    tpu.vector_store %arg11[%c0_26, %c0_27], %41 {strides = array<i32>} : memref<256x256xf32, #tpu.memory_space<vmem>>, vector<256x256xf32>,
    %c0_28 = arith.constant 0 : index
    %c0_29 = arith.constant 0 : index
    %43 = vector.load %arg12[%c0_28, %c0_29] : memref<256x128xf32, #tpu.memory_space<vmem>>, vector<256x128xf32>
    tpu.vector_store %arg12[%c0_28, %c0_29], %15 {strides = array<i32>} : memref<256x128xf32, #tpu.memory_space<vmem>>, vector<256x128xf32>,
    return
  }
  func.func @transform_0(%arg0: i32) -> (i32, i32) {
    %c0_i32 = arith.constant 0 : i32
    %c0_i32_0 = arith.constant 0 : i32
    return %arg0, %c0_i32 : i32, i32
  }
  func.func @transform_1(%arg0: i32) -> (i32, i32) {
    %c0_i32 = arith.constant 0 : i32
    %c0_i32_0 = arith.constant 0 : i32
    return %arg0, %c0_i32 : i32, i32
  }
  func.func @transform_2(%arg0: i32) -> (i32, i32) {
    %c0_i32 = arith.constant 0 : i32
    %c0_i32_0 = arith.constant 0 : i32
    %c0_i32_1 = arith.constant 0 : i32
    return %c0_i32, %c0_i32_0 : i32, i32
  }
  func.func @transform_3(%arg0: i32) -> (i32, i32) {
    %c0_i32 = arith.constant 0 : i32
    %c0_i32_0 = arith.constant 0 : i32
    %c0_i32_1 = arith.constant 0 : i32
    return %c0_i32, %c0_i32_0 : i32, i32
  }
  func.func @transform_4(%arg0: i32) -> (i32, i32) {
    %c0_i32 = arith.constant 0 : i32
    %c0_i32_0 = arith.constant 0 : i32
    %c0_i32_1 = arith.constant 0 : i32
    return %c0_i32, %c0_i32_0 : i32, i32
  }
  func.func @transform_5(%arg0: i32) -> (i32, i32) {
    %c0_i32 = arith.constant 0 : i32
    %c0_i32_0 = arith.constant 0 : i32
    %c0_i32_1 = arith.constant 0 : i32
    return %c0_i32, %c0_i32_0 : i32, i32
  }
  func.func @transform_6(%arg0: i32) -> (i32, i32) {
    %c0_i32 = arith.constant 0 : i32
    %c0_i32_0 = arith.constant 0 : i32
    %c0_i32_1 = arith.constant 0 : i32
    return %c0_i32, %c0_i32_0 : i32, i32
  }
  func.func @transform_7(%arg0: i32) -> (i32, i32) {
    %c0_i32 = arith.constant 0 : i32
    %c0_i32_0 = arith.constant 0 : i32
    %c0_i32_1 = arith.constant 0 : i32
    return %c0_i32, %c0_i32_0 : i32, i32
  }
  func.func @transform_8(%arg0: i32) -> (i32, i32) {
    %c0_i32 = arith.constant 0 : i32
    %c0_i32_0 = arith.constant 0 : i32
    %c0_i32_1 = arith.constant 0 : i32
    return %c0_i32, %c0_i32_0 : i32, i32
  }
  func.func @transform_9(%arg0: i32) -> (i32, i32) {
    %c0_i32 = arith.constant 0 : i32
    %c0_i32_0 = arith.constant 0 : i32
    %c0_i32_1 = arith.constant 0 : i32
    return %c0_i32, %c0_i32_0 : i32, i32
  }
  func.func @transform_10(%arg0: i32) -> (i32, i32) {
    %c0_i32 = arith.constant 0 : i32
    %c0_i32_0 = arith.constant 0 : i32
    return %arg0, %c0_i32 : i32, i32
  }
  func.func @transform_11(%arg0: i32) -> (i32, i32) {
    %c0_i32 = arith.constant 0 : i32
    %c0_i32_0 = arith.constant 0 : i32
    return %arg0, %c0_i32 : i32, i32
  }
}

</mosaic_0001>

<llo_original>
// kernel: tpu_custom_call.1
$region0: #{tpu_custom_call.1}
  #allocation0 [shape = 'u32[]', space=smem, size = 0x4, offset = 0x4, fixed_abs, tag = 'smem constant byte address 0x4 - core index']
  #allocation1 [shape = 'u32[144,128]{1,0:T(1,128)}', space=vmem, size = 0x12000, scoped, tag = 'internal scratch']
  %s0 = inlined_call_operand.hbm [shape: f32[512,256], index: 0, kind: input, shape index: {}]
  %s1 = inlined_call_operand.vmem [shape: f32[512,32], index: 1, kind: input, shape index: {}]
  %s2 = inlined_call_operand.vmem [shape: bf16[256,128], index: 2, kind: input, shape index: {}]
  %s3 = inlined_call_operand.vmem [shape: f32[1,128], index: 3, kind: input, shape index: {}]
  %s4 = inlined_call_operand.vmem [shape: bf16[128,128], index: 4, kind: input, shape index: {}]
  %s5 = inlined_call_operand.vmem [shape: f32[1,128], index: 5, kind: input, shape index: {}]
  %s6 = inlined_call_operand.vmem [shape: bf16[32,128], index: 6, kind: input, shape index: {}]
  %s7 = inlined_call_operand.vmem [shape: f32[1,128], index: 7, kind: input, shape index: {}]
  %s8 = inlined_call_operand.vmem [shape: bf16[128,256], index: 8, kind: input, shape index: {}]
  %s9 = inlined_call_operand.vmem [shape: f32[1,256], index: 9, kind: input, shape index: {}]
  %s10 = inlined_call_operand.hbm [shape: f32[512,256], index: 10, kind: output, shape index: {0}]
  %s11 = inlined_call_operand.hbm [shape: f32[512,128], index: 11, kind: output, shape index: {1}]
  %12 = xla_tuple %s10, %s11
  %s13 = sld [smem:[#allocation0]]
  $region85: #{tpu_custom_call.1} parent=0
    _
  %s15 = ssub.s32 1, %s13
  %s16 = scalar_select 0, %s15, %s13
  $region1: #{tpu_custom_call.1} parent=0
    #allocation2 [shape = 'u8[524288]{0}', space=vmem, size = 0x80000, scoped, tag = 'input window, operand 0']
    #allocation3 [shape = 's32[2]{0}', space=sflag, size = 0x8, scoped, tag = 'scoped memory for tpu_custom_call.1']
    #allocation4 [shape = 's32[2]{0}', space=sflag, size = 0x8, scoped, tag = 'scoped memory for tpu_custom_call.1']
    #allocation5 [shape = 'u8[524288]{0}', space=vmem, size = 0x80000, scoped, tag = 'output window, operand 0']
    #allocation6 [shape = 'u8[262144]{0}', space=vmem, size = 0x40000, scoped, tag = 'output window, operand 1']
    #allocation7 [shape = 's32[2]{0}', space=sflag, size = 0x8, scoped, tag = 'scoped memory for tpu_custom_call.1']
    %17 = vsyncpa [#allocation3], 0
    %s18 = scalar_lea.sflag [#allocation3], 1
    %19 = vsyncpa %s18, 0
    %20 = vsyncpa [#allocation4], 0
    %s21 = scalar_lea.sflag [#allocation4], 1
    %22 = vsyncpa %s21, 0
    %23 = vsyncpa [#allocation7], 0
    %s24 = scalar_lea.sflag [#allocation7], 1
    %25 = vsyncpa %s24, 0
    loop: start=0, step=1, limit=4
    $region2: #{tpu_custom_call.1} parent=1 // loop_pre_header
      _
    $region3: #{tpu_custom_call.1} parent=1 // loop_header
      %s27 = sphi 0, %s31
      %p28 = scmp.ge.s32.totalorder %s27, 4
      %s37 = sphi 0, %s39
      %s40 = sphi 0, %s37
      %s41 = sphi 0, %s40
      %s57 = sphi 0, %s41
      %s63 = sphi 0, %s65
      %s66 = sphi 0, %s63
      %s67 = sphi 0, %s66
      %s83 = sphi 0, %s67
      %s87 = sphi 0, %s87
      %s89 = sphi 0, %s87
      %s90 = sphi 0, %s89
      %s104 = sphi 0, %s90
      %s108 = sphi 0, %s108
      %s110 = sphi 0, %s108
      %s111 = sphi 0, %s110
      %s125 = sphi 0, %s111
      %s129 = sphi 0, %s129
      %s131 = sphi 0, %s129
      %s132 = sphi 0, %s131
      %s146 = sphi 0, %s132
      %s150 = sphi 0, %s150
      %s152 = sphi 0, %s150
      %s153 = sphi 0, %s152
      %s167 = sphi 0, %s153
      %s171 = sphi 0, %s171
      %s173 = sphi 0, %s171
      %s174 = sphi 0, %s173
      %s188 = sphi 0, %s174
      %s192 = sphi 0, %s192
      %s194 = sphi 0, %s192
      %s195 = sphi 0, %s194
      %s209 = sphi 0, %s195
      %s213 = sphi 0, %s213
      %s215 = sphi 0, %s213
      %s216 = sphi 0, %s215
      %s230 = sphi 0, %s216
      %s234 = sphi 0, %s234
      %s236 = sphi 0, %s234
      %s237 = sphi 0, %s236
      %s251 = sphi 0, %s237
      %s257 = sphi 0, %s259
      %s260 = sphi 0, %s257
      %s261 = sphi 0, %s260
      %s277 = sphi 0, %s261
      %s283 = sphi 0, %s285
      %s286 = sphi 0, %s283
      %s287 = sphi 0, %s286
      %s303 = sphi 0, %s287
    $region4: #{tpu_custom_call.1} parent=1 // loop_header_branch
      %30 = sbr.rel (%p28) target = $region8
    $region5: #{tpu_custom_call.1} parent=1 // loop_body
      %s32 = ssub.s32 %s27, 1
      %s33 = ssub.s32 %s27, 2
      %s34 = sadd.s32 %s27, 1
      %s35 = ssub.s32 %s27, %s34
      %p36 = scmp.eq.s32.totalorder %s35, 0
      %s38 = sadd.s32 %s37, 1
      %s39 = scalar_select %p36, %s37, %s38
      %p42 = pneg %p36
      %p43 = scmp.eq.s32.totalorder %s27, 1
      %p44 = por %p42, %p43
      %p45 = scmp.ne.s32.totalorder %s37, %s40
      %p46 = scmp.eq.s32.totalorder %s27, 0
      %p47 = por %p45, %p46
      %p48 = scmp.ne.s32.totalorder %s37, %s40
      %p49 = scmp.eq.s32.totalorder %s32, 1
      %p50 = por %p48, %p49
      %p51 = scmp.ne.s32.totalorder %s40, %s41
      %p52 = scmp.eq.s32.totalorder %s32, 0
      %p53 = por %p51, %p52
      %p54 = scmp.ne.s32.totalorder %s40, %s41
      %p55 = scmp.eq.s32.totalorder %s33, 1
      %p56 = por %p54, %p55
      %p58 = scmp.ne.s32.totalorder %s41, %s57
      %p59 = scmp.eq.s32.totalorder %s33, 0
      %p60 = por %p58, %p59
      %s61 = ssub.s32 %s27, %s34
      %p62 = scmp.eq.s32.totalorder %s61, 0
      %s64 = sadd.s32 %s63, 1
      %s65 = scalar_select %p62, %s63, %s64
      %p68 = pneg %p62
      %p69 = scmp.eq.s32.totalorder %s27, 1
      %p70 = por %p68, %p69
      %p71 = scmp.ne.s32.totalorder %s63, %s66
      %p72 = scmp.eq.s32.totalorder %s27, 0
      %p73 = por %p71, %p72
      %p74 = scmp.ne.s32.totalorder %s63, %s66
      %p75 = scmp.eq.s32.totalorder %s32, 1
      %p76 = por %p74, %p75
      %p77 = scmp.ne.s32.totalorder %s66, %s67
      %p78 = scmp.eq.s32.totalorder %s32, 0
      %p79 = por %p77, %p78
      %p80 = scmp.ne.s32.totalorder %s66, %s67
      %p81 = scmp.eq.s32.totalorder %s33, 1
      %p82 = por %p80, %p81
      %p84 = scmp.ne.s32.totalorder %s67, %s83
      %p85 = scmp.eq.s32.totalorder %s33, 0
      %p86 = por %p84, %p85
      %s88 = sadd.s32 %s87, 1
      %p91 = scmp.eq.s32.totalorder %s27, 1
      %p92 = scmp.ne.s32.totalorder %s87, %s89
      %p93 = scmp.eq.s32.totalorder %s27, 0
      %p94 = por %p92, %p93
      %p95 = scmp.ne.s32.totalorder %s87, %s89
      %p96 = scmp.eq.s32.totalorder %s32, 1
      %p97 = por %p95, %p96
      %p98 = scmp.ne.s32.totalorder %s89, %s90
      %p99 = scmp.eq.s32.totalorder %s32, 0
      %p100 = por %p98, %p99
      %p101 = scmp.ne.s32.totalorder %s89, %s90
      %p102 = scmp.eq.s32.totalorder %s33, 1
      %p103 = por %p101, %p102
      %p105 = scmp.ne.s32.totalorder %s90, %s104
      %p106 = scmp.eq.s32.totalorder %s33, 0
      %p107 = por %p105, %p106
      %s109 = sadd.s32 %s108, 1
      %p112 = scmp.eq.s32.totalorder %s27, 1
      %p113 = scmp.ne.s32.totalorder %s108, %s110
      %p114 = scmp.eq.s32.totalorder %s27, 0
      %p115 = por %p113, %p114
      %p116 = scmp.ne.s32.totalorder %s108, %s110
      %p117 = scmp.eq.s32.totalorder %s32, 1
      %p118 = por %p116, %p117
      %p119 = scmp.ne.s32.totalorder %s110, %s111
      %p120 = scmp.eq.s32.totalorder %s32, 0
      %p121 = por %p119, %p120
      %p122 = scmp.ne.s32.totalorder %s110, %s111
      %p123 = scmp.eq.s32.totalorder %s33, 1
      %p124 = por %p122, %p123
      %p126 = scmp.ne.s32.totalorder %s111, %s125
      %p127 = scmp.eq.s32.totalorder %s33, 0
      %p128 = por %p126, %p127
      %s130 = sadd.s32 %s129, 1
      %p133 = scmp.eq.s32.totalorder %s27, 1
      %p134 = scmp.ne.s32.totalorder %s129, %s131
      %p135 = scmp.eq.s32.totalorder %s27, 0
      %p136 = por %p134, %p135
      %p137 = scmp.ne.s32.totalorder %s129, %s131
      %p138 = scmp.eq.s32.totalorder %s32, 1
      %p139 = por %p137, %p138
      %p140 = scmp.ne.s32.totalorder %s131, %s132
      %p141 = scmp.eq.s32.totalorder %s32, 0
      %p142 = por %p140, %p141
      %p143 = scmp.ne.s32.totalorder %s131, %s132
      %p144 = scmp.eq.s32.totalorder %s33, 1
      %p145 = por %p143, %p144
      %p147 = scmp.ne.s32.totalorder %s132, %s146
      %p148 = scmp.eq.s32.totalorder %s33, 0
      %p149 = por %p147, %p148
      %s151 = sadd.s32 %s150, 1
      %p154 = scmp.eq.s32.totalorder %s27, 1
      %p155 = scmp.ne.s32.totalorder %s150, %s152
      %p156 = scmp.eq.s32.totalorder %s27, 0
      %p157 = por %p155, %p156
      %p158 = scmp.ne.s32.totalorder %s150, %s152
      %p159 = scmp.eq.s32.totalorder %s32, 1
      %p160 = por %p158, %p159
      %p161 = scmp.ne.s32.totalorder %s152, %s153
      %p162 = scmp.eq.s32.totalorder %s32, 0
      %p163 = por %p161, %p162
      %p164 = scmp.ne.s32.totalorder %s152, %s153
      %p165 = scmp.eq.s32.totalorder %s33, 1
      %p166 = por %p164, %p165
      %p168 = scmp.ne.s32.totalorder %s153, %s167
      %p169 = scmp.eq.s32.totalorder %s33, 0
      %p170 = por %p168, %p169
      %s172 = sadd.s32 %s171, 1
      %p175 = scmp.eq.s32.totalorder %s27, 1
      %p176 = scmp.ne.s32.totalorder %s171, %s173
      %p177 = scmp.eq.s32.totalorder %s27, 0
      %p178 = por %p176, %p177
      %p179 = scmp.ne.s32.totalorder %s171, %s173
      %p180 = scmp.eq.s32.totalorder %s32, 1
      %p181 = por %p179, %p180
      %p182 = scmp.ne.s32.totalorder %s173, %s174
      %p183 = scmp.eq.s32.totalorder %s32, 0
      %p184 = por %p182, %p183
      %p185 = scmp.ne.s32.totalorder %s173, %s174
      %p186 = scmp.eq.s32.totalorder %s33, 1
      %p187 = por %p185, %p186
      %p189 = scmp.ne.s32.totalorder %s174, %s188
      %p190 = scmp.eq.s32.totalorder %s33, 0
      %p191 = por %p189, %p190
      %s193 = sadd.s32 %s192, 1
      %p196 = scmp.eq.s32.totalorder %s27, 1
      %p197 = scmp.ne.s32.totalorder %s192, %s194
      %p198 = scmp.eq.s32.totalorder %s27, 0
      %p199 = por %p197, %p198
      %p200 = scmp.ne.s32.totalorder %s192, %s194
      %p201 = scmp.eq.s32.totalorder %s32, 1
      %p202 = por %p200, %p201
      %p203 = scmp.ne.s32.totalorder %s194, %s195
      %p204 = scmp.eq.s32.totalorder %s32, 0
      %p205 = por %p203, %p204
      %p206 = scmp.ne.s32.totalorder %s194, %s195
      %p207 = scmp.eq.s32.totalorder %s33, 1
      %p208 = por %p206, %p207
      %p210 = scmp.ne.s32.totalorder %s195, %s209
      %p211 = scmp.eq.s32.totalorder %s33, 0
      %p212 = por %p210, %p211
      %s214 = sadd.s32 %s213, 1
      %p217 = scmp.eq.s32.totalorder %s27, 1
      %p218 = scmp.ne.s32.totalorder %s213, %s215
      %p219 = scmp.eq.s32.totalorder %s27, 0
      %p220 = por %p218, %p219
      %p221 = scmp.ne.s32.totalorder %s213, %s215
      %p222 = scmp.eq.s32.totalorder %s32, 1
      %p223 = por %p221, %p222
      %p224 = scmp.ne.s32.totalorder %s215, %s216
      %p225 = scmp.eq.s32.totalorder %s32, 0
      %p226 = por %p224, %p225
      %p227 = scmp.ne.s32.totalorder %s215, %s216
      %p228 = scmp.eq.s32.totalorder %s33, 1
      %p229 = por %p227, %p228
      %p231 = scmp.ne.s32.totalorder %s216, %s230
      %p232 = scmp.eq.s32.totalorder %s33, 0
      %p233 = por %p231, %p232
      %s235 = sadd.s32 %s234, 1
      %p238 = scmp.eq.s32.totalorder %s27, 1
      %p239 = scmp.ne.s32.totalorder %s234, %s236
      %p240 = scmp.eq.s32.totalorder %s27, 0
      %p241 = por %p239, %p240
      %p242 = scmp.ne.s32.totalorder %s234, %s236
      %p243 = scmp.eq.s32.totalorder %s32, 1
      %p244 = por %p242, %p243
      %p245 = scmp.ne.s32.totalorder %s236, %s237
      %p246 = scmp.eq.s32.totalorder %s32, 0
      %p247 = por %p245, %p246
      %p248 = scmp.ne.s32.totalorder %s236, %s237
      %p249 = scmp.eq.s32.totalorder %s33, 1
      %p250 = por %p248, %p249
      %p252 = scmp.ne.s32.totalorder %s237, %s251
      %p253 = scmp.eq.s32.totalorder %s33, 0
      %p254 = por %p252, %p253
      %s255 = ssub.s32 %s27, %s34
      %p256 = scmp.eq.s32.totalorder %s255, 0
      %s258 = sadd.s32 %s257, 1
      %s259 = scalar_select %p256, %s257, %s258
      %p262 = pneg %p256
      %p263 = scmp.eq.s32.totalorder %s27, 1
      %p264 = por %p262, %p263
      %p265 = scmp.ne.s32.totalorder %s257, %s260
      %p266 = scmp.eq.s32.totalorder %s27, 0
      %p267 = por %p265, %p266
      %p268 = scmp.ne.s32.totalorder %s257, %s260
      %p269 = scmp.eq.s32.totalorder %s32, 1
      %p270 = por %p268, %p269
      %p271 = scmp.ne.s32.totalorder %s260, %s261
      %p272 = scmp.eq.s32.totalorder %s32, 0
      %p273 = por %p271, %p272
      %p274 = scmp.ne.s32.totalorder %s260, %s261
      %p275 = scmp.eq.s32.totalorder %s33, 1
      %p276 = por %p274, %p275
      %p278 = scmp.ne.s32.totalorder %s261, %s277
      %p279 = scmp.eq.s32.totalorder %s33, 0
      %p280 = por %p278, %p279
      %s281 = ssub.s32 %s27, %s34
      %p282 = scmp.eq.s32.totalorder %s281, 0
      %s284 = sadd.s32 %s283, 1
      %s285 = scalar_select %p282, %s283, %s284
      %p288 = pneg %p282
      %p289 = scmp.eq.s32.totalorder %s27, 1
      %p290 = por %p288, %p289
      %p291 = scmp.ne.s32.totalorder %s283, %s286
      %p292 = scmp.eq.s32.totalorder %s27, 0
      %p293 = por %p291, %p292
      %p294 = scmp.ne.s32.totalorder %s283, %s286
      %p295 = scmp.eq.s32.totalorder %s32, 1
      %p296 = por %p294, %p295
      %p297 = scmp.ne.s32.totalorder %s286, %s287
      %p298 = scmp.eq.s32.totalorder %s32, 0
      %p299 = por %p297, %p298
      %p300 = scmp.ne.s32.totalorder %s286, %s287
      %p301 = scmp.eq.s32.totalorder %s33, 1
      %p302 = por %p300, %p301
      %p304 = scmp.ne.s32.totalorder %s287, %s303
      %p305 = scmp.eq.s32.totalorder %s33, 0
      %p306 = por %p304, %p305
      %p307 = scmp.le.s32.totalorder 1, %s27
      %p308 = scmp.lt.s32.totalorder %s27, 3
      %p309 = pnand %p307, %p308
      %p310 = pneg %p309
      // Predicated region
      $region9: #{tpu_custom_call.1} parent=5 // pred_check
        _
      $region10: #{tpu_custom_call.1} parent=5 // pred_check_branch
        %312 = sbr.rel (%p309) target = $region12
      $region11: #{tpu_custom_call.1} parent=5 // pred_region
        %s313 = ssub.s32 %s27, 1
        // Predicated region
        $region13: #{tpu_custom_call.1} parent=11 // pred_check
          %p314 = pneg %p100
        $region14: #{tpu_custom_call.1} parent=11 // pred_check_branch
          %316 = sbr.rel (%p314) target = $region16
        $region15: #{tpu_custom_call.1} parent=11 // pred_region
          _
        $region16: #{tpu_custom_call.1} parent=11 // pred_fallthru
          _
        // Predicated region
        $region17: #{tpu_custom_call.1} parent=11 // pred_check
          %p317 = pneg %p121
        $region18: #{tpu_custom_call.1} parent=11 // pred_check_branch
          %319 = sbr.rel (%p317) target = $region20
        $region19: #{tpu_custom_call.1} parent=11 // pred_region
          _
        $region20: #{tpu_custom_call.1} parent=11 // pred_fallthru
          _
        // Predicated region
        $region21: #{tpu_custom_call.1} parent=11 // pred_check
          %p320 = pneg %p142
        $region22: #{tpu_custom_call.1} parent=11 // pred_check_branch
          %322 = sbr.rel (%p320) target = $region24
        $region23: #{tpu_custom_call.1} parent=11 // pred_region
          _
        $region24: #{tpu_custom_call.1} parent=11 // pred_fallthru
          _
        // Predicated region
        $region25: #{tpu_custom_call.1} parent=11 // pred_check
          %p323 = pneg %p163
        $region26: #{tpu_custom_call.1} parent=11 // pred_check_branch
          %325 = sbr.rel (%p323) target = $region28
        $region27: #{tpu_custom_call.1} parent=11 // pred_region
          _
        $region28: #{tpu_custom_call.1} parent=11 // pred_fallthru
          _
        // Predicated region
        $region29: #{tpu_custom_call.1} parent=11 // pred_check
          %p326 = pneg %p184
        $region30: #{tpu_custom_call.1} parent=11 // pred_check_branch
          %328 = sbr.rel (%p326) target = $region32
        $region31: #{tpu_custom_call.1} parent=11 // pred_region
          _
        $region32: #{tpu_custom_call.1} parent=11 // pred_fallthru
          _
        // Predicated region
        $region33: #{tpu_custom_call.1} parent=11 // pred_check
          %p329 = pneg %p205
        $region34: #{tpu_custom_call.1} parent=11 // pred_check_branch
          %331 = sbr.rel (%p329) target = $region36
        $region35: #{tpu_custom_call.1} parent=11 // pred_region
          _
        $region36: #{tpu_custom_call.1} parent=11 // pred_fallthru
          _
        // Predicated region
        $region37: #{tpu_custom_call.1} parent=11 // pred_check
          %p332 = pneg %p226
        $region38: #{tpu_custom_call.1} parent=11 // pred_check_branch
          %334 = sbr.rel (%p332) target = $region40
        $region39: #{tpu_custom_call.1} parent=11 // pred_region
          _
        $region40: #{tpu_custom_call.1} parent=11 // pred_fallthru
          _
        // Predicated region
        $region41: #{tpu_custom_call.1} parent=11 // pred_check
          %p335 = pneg %p247
        $region42: #{tpu_custom_call.1} parent=11 // pred_check_branch
          %337 = sbr.rel (%p335) target = $region44
        $region43: #{tpu_custom_call.1} parent=11 // pred_region
          _
        $region44: #{tpu_custom_call.1} parent=11 // pred_fallthru
          _
      $region12: #{tpu_custom_call.1} parent=5 // pred_fallthru
        _
      %p338 = scmp.lt.s32.totalorder %s27, 2
      // Predicated region
      $region45: #{tpu_custom_call.1} parent=5 // pred_check
        %p339 = pneg %p338
      $region46: #{tpu_custom_call.1} parent=5 // pred_check_branch
        %341 = sbr.rel (%p339) target = $region48
      $region47: #{tpu_custom_call.1} parent=5 // pred_region
        // Predicated region
        $region49: #{tpu_custom_call.1} parent=47 // pred_check
          %p342 = pneg %p47
        $region50: #{tpu_custom_call.1} parent=47 // pred_check_branch
          %344 = sbr.rel (%p342) target = $region52
        $region51: #{tpu_custom_call.1} parent=47 // pred_region
          %s345 = sand.u32 %s37, 1
          %s346 = scalar_lea.sflag [#allocation3], %s345
          %s347 = sand.u32 %s37, 1
          %s348 = smul.addr %s347, 512
          %s349 = scalar_lea.vmem [#allocation2], %s348
          %s350 = smul.u32 32, %s27
          %s352 = ssub.s32 8192, 8192
          %353 = vsyncadd %s346, %s352
          %s354 = smul.addr %s350, 2
          %s355 = smul.addr %s354, 128
          %s356 = scalar_lea.hbm %s0, %s355
          %s357 = sshll.u32 %s349, 4
          %s358 = int_to_ptr.vmem [resolvable:$true] %s357
          %363 = dma.hbm_to_vmem [thread:$0]  %s356, 8192, %s358, %s346, 256, 256, 16
        $region52: #{tpu_custom_call.1} parent=47 // pred_fallthru
          _
        // Predicated region
        $region53: #{tpu_custom_call.1} parent=47 // pred_check
          %p364 = pneg %p73
        $region54: #{tpu_custom_call.1} parent=47 // pred_check_branch
          %366 = sbr.rel (%p364) target = $region56
        $region55: #{tpu_custom_call.1} parent=47 // pred_region
          %s367 = smul.u32 32, %s27
          %p368 = scmp.lt.s32.totalorder %s367, 63
          %s369 = scalar_select %p368, %s367, 63
          %s370 = smul.addr %s369, 8
          %s371 = scalar_lea.vmem %s1, %s370
          %s372 = smul.u32 32, %s27
        $region56: #{tpu_custom_call.1} parent=47 // pred_fallthru
          _
      $region48: #{tpu_custom_call.1} parent=5 // pred_fallthru
        _
      %p373 = scmp.le.s32.totalorder 1, %s27
      %p374 = scmp.lt.s32.totalorder %s27, 3
      %p375 = pnand %p373, %p374
      %p376 = pneg %p375
      // Predicated region
      $region57: #{tpu_custom_call.1} parent=5 // pred_check
        _
      $region58: #{tpu_custom_call.1} parent=5 // pred_check_branch
        %378 = sbr.rel (%p375) target = $region60
      $region59: #{tpu_custom_call.1} parent=5 // pred_region
        %s379 = ssub.s32 %s27, 1
        %s380 = sand.u32 %s40, 1
        %s381 = scalar_lea.sflag [#allocation3], %s380
        %s382 = sand.u32 %s40, 1
        %s383 = smul.addr %s382, 512
        %s384 = scalar_lea.vmem [#allocation2], %s383
        // Predicated region
        $region61: #{tpu_custom_call.1} parent=59 // pred_check
          %p385 = pneg %p53
        $region62: #{tpu_custom_call.1} parent=59 // pred_check_branch
          %387 = sbr.rel (%p385) target = $region64
        $region63: #{tpu_custom_call.1} parent=59 // pred_region
          %388 = dma.done %s381, 8192
        $region64: #{tpu_custom_call.1} parent=59 // pred_fallthru
          _
        %s389 = sand.u32 %s40, 1
        %s390 = scalar_lea.sflag [#allocation3], %s389
        %s391 = sand.u32 %s40, 1
        %s392 = smul.addr %s391, 512
        %s393 = scalar_lea.vmem [#allocation2], %s392
        %p394 = pneg %p53
        %p395 = pneg %p50
        %s396 = smul.u32 32, %s32
        %p397 = scmp.lt.s32.totalorder %s396, 63
        %s398 = scalar_select %p397, %s396, 63
        %s399 = smul.addr %s398, 8
        %s400 = scalar_lea.vmem %s1, %s399
        %p401 = pneg %p79
        %p402 = pneg %p76
        %p403 = pneg %p100
        %p404 = pneg %p97
        %p405 = pneg %p121
        %p406 = pneg %p118
        %p407 = pneg %p142
        %p408 = pneg %p139
        %p409 = pneg %p163
        %p410 = pneg %p160
        %p411 = pneg %p184
        %p412 = pneg %p181
        %p413 = pneg %p205
        %p414 = pneg %p202
        %p415 = pneg %p226
        %p416 = pneg %p223
        %p417 = pneg %p247
        %p418 = pneg %p244
        %p419 = pneg %p273
        %p420 = pneg %p270
        %s421 = sand.u32 %s260, 1
        %s422 = scalar_lea.sflag [#allocation4], %s421
        %s423 = sand.u32 %s260, 1
        %s424 = smul.addr %s423, 512
        %s425 = scalar_lea.vmem [#allocation5], %s424
        %p426 = pneg %p299
        %p427 = pneg %p296
        %s428 = sand.u32 %s286, 1
        %s429 = scalar_lea.sflag [#allocation7], %s428
        %s430 = sand.u32 %s286, 1
        %s431 = smul.addr %s430, 256
        %s432 = scalar_lea.vmem [#allocation6], %s431
        %s433 = smul.u32 32, %s32
        %s434 = smul.u32 32, %s32
        %p435 = scmp.lt.s32.totalorder %s434, 63
        %s436 = scalar_select %p435, %s434, 63
        %s437 = smul.addr %s436, 8
        %s438 = scalar_lea.vmem %s1, %s437
        %s439 = smul.u32 32, %s32
        %s440 = smul.u32 32, %s32
        %s441 = smul.u32 32, %s32
        %v443 = vld [vmem:[%s384] sm:$0xff]
        %v444 = vld [vmem:[%s384 + $0x8] sm:$0xff]
        %v445 = vld [vmem:[%s384 + $0x10] sm:$0xff]
        %v446 = vld [vmem:[%s384 + $0x18] sm:$0xff]
        %v447 = vld [vmem:[%s384 + $0x20] sm:$0xff]
        %v448 = vld [vmem:[%s384 + $0x28] sm:$0xff]
        %v449 = vld [vmem:[%s384 + $0x30] sm:$0xff]
        %v450 = vld [vmem:[%s384 + $0x38] sm:$0xff]
        %v451 = vld [vmem:[%s384 + $0x40] sm:$0xff]
        %v452 = vld [vmem:[%s384 + $0x48] sm:$0xff]
        %v453 = vld [vmem:[%s384 + $0x50] sm:$0xff]
        %v454 = vld [vmem:[%s384 + $0x58] sm:$0xff]
        %v455 = vld [vmem:[%s384 + $0x60] sm:$0xff]
        %v456 = vld [vmem:[%s384 + $0x68] sm:$0xff]
        %v457 = vld [vmem:[%s384 + $0x70] sm:$0xff]
        %v458 = vld [vmem:[%s384 + $0x78] sm:$0xff]
        %v459 = vld [vmem:[%s384 + $0x80] sm:$0xff]
        %v460 = vld [vmem:[%s384 + $0x88] sm:$0xff]
        %v461 = vld [vmem:[%s384 + $0x90] sm:$0xff]
        %v462 = vld [vmem:[%s384 + $0x98] sm:$0xff]
        %v463 = vld [vmem:[%s384 + $0xa0] sm:$0xff]
        %v464 = vld [vmem:[%s384 + $0xa8] sm:$0xff]
        %v465 = vld [vmem:[%s384 + $0xb0] sm:$0xff]
        %v466 = vld [vmem:[%s384 + $0xb8] sm:$0xff]
        %v467 = vld [vmem:[%s384 + $0xc0] sm:$0xff]
        %v468 = vld [vmem:[%s384 + $0xc8] sm:$0xff]
        %v469 = vld [vmem:[%s384 + $0xd0] sm:$0xff]
        %v470 = vld [vmem:[%s384 + $0xd8] sm:$0xff]
        %v471 = vld [vmem:[%s384 + $0xe0] sm:$0xff]
        %v472 = vld [vmem:[%s384 + $0xe8] sm:$0xff]
        %v473 = vld [vmem:[%s384 + $0xf0] sm:$0xff]
        %v474 = vld [vmem:[%s384 + $0xf8] sm:$0xff]
        %v475 = vld [vmem:[%s384 + $0x100] sm:$0xff]
        %v476 = vld [vmem:[%s384 + $0x108] sm:$0xff]
        %v477 = vld [vmem:[%s384 + $0x110] sm:$0xff]
        %v478 = vld [vmem:[%s384 + $0x118] sm:$0xff]
        %v479 = vld [vmem:[%s384 + $0x120] sm:$0xff]
        %v480 = vld [vmem:[%s384 + $0x128] sm:$0xff]
        %v481 = vld [vmem:[%s384 + $0x130] sm:$0xff]
        %v482 = vld [vmem:[%s384 + $0x138] sm:$0xff]
        %v483 = vld [vmem:[%s384 + $0x140] sm:$0xff]
        %v484 = vld [vmem:[%s384 + $0x148] sm:$0xff]
        %v485 = vld [vmem:[%s384 + $0x150] sm:$0xff]
        %v486 = vld [vmem:[%s384 + $0x158] sm:$0xff]
        %v487 = vld [vmem:[%s384 + $0x160] sm:$0xff]
        %v488 = vld [vmem:[%s384 + $0x168] sm:$0xff]
        %v489 = vld [vmem:[%s384 + $0x170] sm:$0xff]
        %v490 = vld [vmem:[%s384 + $0x178] sm:$0xff]
        %v491 = vld [vmem:[%s384 + $0x180] sm:$0xff]
        %v492 = vld [vmem:[%s384 + $0x188] sm:$0xff]
        %v493 = vld [vmem:[%s384 + $0x190] sm:$0xff]
        %v494 = vld [vmem:[%s384 + $0x198] sm:$0xff]
        %v495 = vld [vmem:[%s384 + $0x1a0] sm:$0xff]
        %v496 = vld [vmem:[%s384 + $0x1a8] sm:$0xff]
        %v497 = vld [vmem:[%s384 + $0x1b0] sm:$0xff]
        %v498 = vld [vmem:[%s384 + $0x1b8] sm:$0xff]
        %v499 = vld [vmem:[%s384 + $0x1c0] sm:$0xff]
        %v500 = vld [vmem:[%s384 + $0x1c8] sm:$0xff]
        %v501 = vld [vmem:[%s384 + $0x1d0] sm:$0xff]
        %v502 = vld [vmem:[%s384 + $0x1d8] sm:$0xff]
        %v503 = vld [vmem:[%s384 + $0x1e0] sm:$0xff]
        %v504 = vld [vmem:[%s384 + $0x1e8] sm:$0xff]
        %v505 = vld [vmem:[%s384 + $0x1f0] sm:$0xff]
        %v506 = vld [vmem:[%s384 + $0x1f8] sm:$0xff]
        %v507 = vpack.c.bf16 %v445, %v443
        %v508 = vpack.c.bf16 %v446, %v444
        %v509 = vpack.c.bf16 %v449, %v447
        %v510 = vpack.c.bf16 %v450, %v448
        %v511 = vpack.c.bf16 %v453, %v451
        %v512 = vpack.c.bf16 %v454, %v452
        %v513 = vpack.c.bf16 %v457, %v455
        %v514 = vpack.c.bf16 %v458, %v456
        %v515 = vpack.c.bf16 %v461, %v459
        %v516 = vpack.c.bf16 %v462, %v460
        %v517 = vpack.c.bf16 %v465, %v463
        %v518 = vpack.c.bf16 %v466, %v464
        %v519 = vpack.c.bf16 %v469, %v467
        %v520 = vpack.c.bf16 %v470, %v468
        %v521 = vpack.c.bf16 %v473, %v471
        %v522 = vpack.c.bf16 %v474, %v472
        %v523 = vpack.c.bf16 %v477, %v475
        %v524 = vpack.c.bf16 %v478, %v476
        %v525 = vpack.c.bf16 %v481, %v479
        %v526 = vpack.c.bf16 %v482, %v480
        %v527 = vpack.c.bf16 %v485, %v483
        %v528 = vpack.c.bf16 %v486, %v484
        %v529 = vpack.c.bf16 %v489, %v487
        %v530 = vpack.c.bf16 %v490, %v488
        %v531 = vpack.c.bf16 %v493, %v491
        %v532 = vpack.c.bf16 %v494, %v492
        %v533 = vpack.c.bf16 %v497, %v495
        %v534 = vpack.c.bf16 %v498, %v496
        %v535 = vpack.c.bf16 %v501, %v499
        %v536 = vpack.c.bf16 %v502, %v500
        %v537 = vpack.c.bf16 %v505, %v503
        %v538 = vpack.c.bf16 %v506, %v504
        %v539 = vld [vmem:[%s438] sm:$0xff]
        %v540 = vld [vmem:[%s438 + $0x8] sm:$0xff]
        %v541 = vld [vmem:[%s438 + $0x10] sm:$0xff]
        %v542 = vld [vmem:[%s438 + $0x18] sm:$0xff]
        %v543 = vld [vmem:[%s438 + $0x20] sm:$0xff]
        %v544 = vld [vmem:[%s438 + $0x28] sm:$0xff]
        %v545 = vld [vmem:[%s438 + $0x30] sm:$0xff]
        %v546 = vld [vmem:[%s438 + $0x38] sm:$0xff]
        %v547 = vld [vmem:[%s438 + $0x40] sm:$0xff]
        %v548 = vld [vmem:[%s438 + $0x48] sm:$0xff]
        %v549 = vld [vmem:[%s438 + $0x50] sm:$0xff]
        %v550 = vld [vmem:[%s438 + $0x58] sm:$0xff]
        %v551 = vld [vmem:[%s438 + $0x60] sm:$0xff]
        %v552 = vld [vmem:[%s438 + $0x68] sm:$0xff]
        %v553 = vld [vmem:[%s438 + $0x70] sm:$0xff]
        %v554 = vld [vmem:[%s438 + $0x78] sm:$0xff]
        %v555 = vld [vmem:[%s438 + $0x80] sm:$0xff]
        %v556 = vld [vmem:[%s438 + $0x88] sm:$0xff]
        %v557 = vld [vmem:[%s438 + $0x90] sm:$0xff]
        %v558 = vld [vmem:[%s438 + $0x98] sm:$0xff]
        %v559 = vld [vmem:[%s438 + $0xa0] sm:$0xff]
        %v560 = vld [vmem:[%s438 + $0xa8] sm:$0xff]
        %v561 = vld [vmem:[%s438 + $0xb0] sm:$0xff]
        %v562 = vld [vmem:[%s438 + $0xb8] sm:$0xff]
        %v563 = vld [vmem:[%s438 + $0xc0] sm:$0xff]
        %v564 = vld [vmem:[%s438 + $0xc8] sm:$0xff]
        %v565 = vld [vmem:[%s438 + $0xd0] sm:$0xff]
        %v566 = vld [vmem:[%s438 + $0xd8] sm:$0xff]
        %v567 = vld [vmem:[%s438 + $0xe0] sm:$0xff]
        %v568 = vld [vmem:[%s438 + $0xe8] sm:$0xff]
        %v569 = vld [vmem:[%s438 + $0xf0] sm:$0xff]
        %v570 = vld [vmem:[%s438 + $0xf8] sm:$0xff]
        %v571 = vld [vmem:[%s2] sm:$0xf]
        %v572 = vld [vmem:[%s2 + $0x4] sm:$0xf]
        %v573 = vld [vmem:[%s2 + $0x8] sm:$0xf]
        %v574 = vld [vmem:[%s2 + $0xc] sm:$0xf]
        %v575 = vld [vmem:[%s2 + $0x10] sm:$0xf]
        %v576 = vld [vmem:[%s2 + $0x14] sm:$0xf]
        %v577 = vld [vmem:[%s2 + $0x18] sm:$0xf]
        %v578 = vld [vmem:[%s2 + $0x1c] sm:$0xf]
        %v579 = vld [vmem:[%s2 + $0x20] sm:$0xf]
        %v580 = vld [vmem:[%s2 + $0x24] sm:$0xf]
        %v581 = vld [vmem:[%s2 + $0x28] sm:$0xf]
        %v582 = vld [vmem:[%s2 + $0x2c] sm:$0xf]
        %v583 = vld [vmem:[%s2 + $0x30] sm:$0xf]
        %v584 = vld [vmem:[%s2 + $0x34] sm:$0xf]
        %v585 = vld [vmem:[%s2 + $0x38] sm:$0xf]
        %v586 = vld [vmem:[%s2 + $0x3c] sm:$0xf]
        %v587 = vld [vmem:[%s2 + $0x40] sm:$0xf]
        %v588 = vld [vmem:[%s2 + $0x44] sm:$0xf]
        %v589 = vld [vmem:[%s2 + $0x48] sm:$0xf]
        %v590 = vld [vmem:[%s2 + $0x4c] sm:$0xf]
        %v591 = vld [vmem:[%s2 + $0x50] sm:$0xf]
        %v592 = vld [vmem:[%s2 + $0x54] sm:$0xf]
        %v593 = vld [vmem:[%s2 + $0x58] sm:$0xf]
        %v594 = vld [vmem:[%s2 + $0x5c] sm:$0xf]
        %v595 = vld [vmem:[%s2 + $0x60] sm:$0xf]
        %v596 = vld [vmem:[%s2 + $0x64] sm:$0xf]
        %v597 = vld [vmem:[%s2 + $0x68] sm:$0xf]
        %v598 = vld [vmem:[%s2 + $0x6c] sm:$0xf]
        %v599 = vld [vmem:[%s2 + $0x70] sm:$0xf]
        %v600 = vld [vmem:[%s2 + $0x74] sm:$0xf]
        %v601 = vld [vmem:[%s2 + $0x78] sm:$0xf]
        %v602 = vld [vmem:[%s2 + $0x7c] sm:$0xf]
        %v603 = vld [vmem:[%s3] sm:$0x1]
        %v605 = vlaneseq
        %v606 = vshrl.u32 %v605, 7
        %v607 = vsub.s32 0, %v606
        %v608 = vrot.slane %v603, %v607
        %v642 = vunpack.c.l.b16 %v571
        %v643 = vunpack.c.l.b16 %v572
        %v644 = vunpack.c.l.b16 %v573
        %v645 = vunpack.c.l.b16 %v574
        %v646 = vunpack.c.l.b16 %v575
        %v647 = vunpack.c.l.b16 %v576
        %v648 = vunpack.c.l.b16 %v577
        %v649 = vunpack.c.l.b16 %v578
        %v650 = vunpack.c.l.b16 %v579
        %v651 = vunpack.c.l.b16 %v580
        %v652 = vunpack.c.l.b16 %v581
        %v653 = vunpack.c.l.b16 %v582
        %v654 = vunpack.c.l.b16 %v583
        %v655 = vunpack.c.l.b16 %v584
        %v656 = vunpack.c.l.b16 %v585
        %v657 = vunpack.c.l.b16 %v586
        %v658 = vunpack.c.l.b16 %v587
        %v659 = vunpack.c.l.b16 %v588
        %v660 = vunpack.c.l.b16 %v589
        %v661 = vunpack.c.l.b16 %v590
        %v662 = vunpack.c.l.b16 %v591
        %v663 = vunpack.c.l.b16 %v592
        %v664 = vunpack.c.l.b16 %v593
        %v665 = vunpack.c.l.b16 %v594
        %v666 = vunpack.c.l.b16 %v595
        %v667 = vunpack.c.l.b16 %v596
        %v668 = vunpack.c.l.b16 %v597
        %v669 = vunpack.c.l.b16 %v598
        %v670 = vunpack.c.l.b16 %v599
        %v671 = vunpack.c.l.b16 %v600
        %v672 = vunpack.c.l.b16 %v601
        %v673 = vunpack.c.l.b16 %v602
        %v674 = vpack.c.b16 %v643, %v642
        %v675 = vpack.c.b16 %v645, %v644
        %v676 = vpack.c.b16 %v647, %v646
        %v677 = vpack.c.b16 %v649, %v648
        %v678 = vpack.c.b16 %v651, %v650
        %v679 = vpack.c.b16 %v653, %v652
        %v680 = vpack.c.b16 %v655, %v654
        %v681 = vpack.c.b16 %v657, %v656
        %v682 = vpack.c.b16 %v659, %v658
        %v683 = vpack.c.b16 %v661, %v660
        %v684 = vpack.c.b16 %v663, %v662
        %v685 = vpack.c.b16 %v665, %v664
        %v686 = vpack.c.b16 %v667, %v666
        %v687 = vpack.c.b16 %v669, %v668
        %v688 = vpack.c.b16 %v671, %v670
        %v689 = vpack.c.b16 %v673, %v672
        %706 = vmatprep.subr.bf16.mxu0 0
        %707 = vmatpush1.bf16.msra.mxu0 %v674
        %708 = vmatprep.subr.bf16.mxu0 0
        %709 = vmatpush1.bf16.msra.mxu0 %v675
        %710 = vmatprep.subr.bf16.mxu0 0
        %711 = vmatpush1.bf16.msra.mxu0 %v676
        %712 = vmatprep.subr.bf16.mxu0 0
        %713 = vmatpush1.bf16.msra.mxu0 %v677
        %714 = vmatprep.subr.bf16.mxu0 0
        %715 = vmatpush1.bf16.msra.mxu0 %v678
        %716 = vmatprep.subr.bf16.mxu0 0
        %717 = vmatpush1.bf16.msra.mxu0 %v679
        %718 = vmatprep.subr.bf16.mxu0 0
        %719 = vmatpush1.bf16.msra.mxu0 %v680
        %720 = vmatprep.subr.bf16.mxu0 0
        %721 = vmatpush1.bf16.msra.mxu0 %v681
        %722 = vmatprep.subr.bf16.mxu0 0
        %723 = vmatpush1.bf16.msra.mxu0 %v682
        %724 = vmatprep.subr.bf16.mxu0 0
        %725 = vmatpush1.bf16.msra.mxu0 %v683
        %726 = vmatprep.subr.bf16.mxu0 0
        %727 = vmatpush1.bf16.msra.mxu0 %v684
        %728 = vmatprep.subr.bf16.mxu0 0
        %729 = vmatpush1.bf16.msra.mxu0 %v685
        %730 = vmatprep.subr.bf16.mxu0 0
        %731 = vmatpush1.bf16.msra.mxu0 %v686
        %732 = vmatprep.subr.bf16.mxu0 0
        %733 = vmatpush1.bf16.msra.mxu0 %v687
        %734 = vmatprep.subr.bf16.mxu0 0
        %735 = vmatpush1.bf16.msra.mxu0 %v688
        %736 = vmatprep.subr.bf16.mxu0 0
        %737 = vmatpush1.bf16.msra.mxu0 %v689
        %738 = vmatprep.mubr.bf16.mxu0 %v508
        %739 = vmatmul.mubr.bf16.gmra.mrb[0].mxu0 %v507
        %v740 = vpop.f32.mrb[0].mxu0
        %v741 = vadd.f32 %v608, %v740
        %v742 = vpop.f32.mrb[0].mxu0
        %v743 = vpop.f32.mrb[0].mxu0
        %v744 = vadd.f32 %v608, %v743
        %v745 = vpop.f32.mrb[0].mxu0
        %746 = vmatprep.mubr.bf16.mxu0 %v510
        %747 = vmatmul.mubr.bf16.gmra.mrb[0].mxu0 %v509
        %v748 = vpop.f32.mrb[0].mxu0
        %v749 = vadd.f32 %v608, %v748
        %v750 = vpop.f32.mrb[0].mxu0
        %v751 = vpop.f32.mrb[0].mxu0
        %v752 = vadd.f32 %v608, %v751
        %v753 = vpop.f32.mrb[0].mxu0
        %754 = vmatprep.mubr.bf16.mxu0 %v512
        %755 = vmatmul.mubr.bf16.gmra.mrb[0].mxu0 %v511
        %v756 = vpop.f32.mrb[0].mxu0
        %v757 = vadd.f32 %v608, %v756
        %v758 = vpop.f32.mrb[0].mxu0
        %v759 = vpop.f32.mrb[0].mxu0
        %v760 = vadd.f32 %v608, %v759
        %v761 = vpop.f32.mrb[0].mxu0
        %762 = vmatprep.mubr.bf16.mxu0 %v514
        %763 = vmatmul.mubr.bf16.gmra.mrb[0].mxu0 %v513
        %v764 = vpop.f32.mrb[0].mxu0
        %v765 = vadd.f32 %v608, %v764
        %v766 = vpop.f32.mrb[0].mxu0
        %v767 = vpop.f32.mrb[0].mxu0
        %v768 = vadd.f32 %v608, %v767
        %v769 = vpop.f32.mrb[0].mxu0
        %770 = vmatprep.mubr.bf16.mxu0 %v516
        %771 = vmatmul.mubr.bf16.gmra.mrb[0].mxu0 %v515
        %v772 = vpop.f32.mrb[0].mxu0
        %v773 = vadd.f32 %v608, %v772
        %v774 = vpop.f32.mrb[0].mxu0
        %v775 = vpop.f32.mrb[0].mxu0
        %v776 = vadd.f32 %v608, %v775
        %v777 = vpop.f32.mrb[0].mxu0
        %778 = vmatprep.mubr.bf16.mxu0 %v518
        %779 = vmatmul.mubr.bf16.gmra.mrb[0].mxu0 %v517
        %v780 = vpop.f32.mrb[0].mxu0
        %v781 = vadd.f32 %v608, %v780
        %v782 = vpop.f32.mrb[0].mxu0
        %v783 = vpop.f32.mrb[0].mxu0
        %v784 = vadd.f32 %v608, %v783
        %v785 = vpop.f32.mrb[0].mxu0
        %786 = vmatprep.mubr.bf16.mxu0 %v520
        %787 = vmatmul.mubr.bf16.gmra.mrb[0].mxu0 %v519
        %v788 = vpop.f32.mrb[0].mxu0
        %v789 = vadd.f32 %v608, %v788
        %v790 = vpop.f32.mrb[0].mxu0
        %v791 = vpop.f32.mrb[0].mxu0
        %v792 = vadd.f32 %v608, %v791
        %v793 = vpop.f32.mrb[0].mxu0
        %794 = vmatprep.mubr.bf16.mxu0 %v522
        %795 = vmatmul.mubr.bf16.gmra.mrb[0].mxu0 %v521
        %v796 = vpop.f32.mrb[0].mxu0
        %v797 = vadd.f32 %v608, %v796
        %v798 = vpop.f32.mrb[0].mxu0
        %v799 = vpop.f32.mrb[0].mxu0
        %v800 = vadd.f32 %v608, %v799
        %v801 = vpop.f32.mrb[0].mxu0
        %802 = vmatprep.mubr.bf16.mxu0 %v524
        %803 = vmatmul.mubr.bf16.gmra.mrb[0].mxu0 %v523
        %v804 = vpop.f32.mrb[0].mxu0
        %v805 = vadd.f32 %v608, %v804
        %v806 = vpop.f32.mrb[0].mxu0
        %v807 = vpop.f32.mrb[0].mxu0
        %v808 = vadd.f32 %v608, %v807
        %v809 = vpop.f32.mrb[0].mxu0
        %810 = vmatprep.mubr.bf16.mxu0 %v526
        %811 = vmatmul.mubr.bf16.gmra.mrb[0].mxu0 %v525
        %v812 = vpop.f32.mrb[0].mxu0
        %v813 = vadd.f32 %v608, %v812
        %v814 = vpop.f32.mrb[0].mxu0
        %v815 = vpop.f32.mrb[0].mxu0
        %v816 = vadd.f32 %v608, %v815
        %v817 = vpop.f32.mrb[0].mxu0
        %818 = vmatprep.mubr.bf16.mxu0 %v528
        %819 = vmatmul.mubr.bf16.gmra.mrb[0].mxu0 %v527
        %v820 = vpop.f32.mrb[0].mxu0
        %v821 = vadd.f32 %v608, %v820
        %v822 = vpop.f32.mrb[0].mxu0
        %v823 = vpop.f32.mrb[0].mxu0
        %v824 = vadd.f32 %v608, %v823
        %v825 = vpop.f32.mrb[0].mxu0
        %826 = vmatprep.mubr.bf16.mxu0 %v530
        %827 = vmatmul.mubr.bf16.gmra.mrb[0].mxu0 %v529
        %v828 = vpop.f32.mrb[0].mxu0
        %v829 = vadd.f32 %v608, %v828
        %v830 = vpop.f32.mrb[0].mxu0
        %v831 = vpop.f32.mrb[0].mxu0
        %v832 = vadd.f32 %v608, %v831
        %v833 = vpop.f32.mrb[0].mxu0
        %834 = vmatprep.mubr.bf16.mxu0 %v532
        %835 = vmatmul.mubr.bf16.gmra.mrb[0].mxu0 %v531
        %v836 = vpop.f32.mrb[0].mxu0
        %v837 = vadd.f32 %v608, %v836
        %v838 = vpop.f32.mrb[0].mxu0
        %v839 = vpop.f32.mrb[0].mxu0
        %v840 = vadd.f32 %v608, %v839
        %v841 = vpop.f32.mrb[0].mxu0
        %842 = vmatprep.mubr.bf16.mxu0 %v534
        %843 = vmatmul.mubr.bf16.gmra.mrb[0].mxu0 %v533
        %v844 = vpop.f32.mrb[0].mxu0
        %v845 = vadd.f32 %v608, %v844
        %v846 = vpop.f32.mrb[0].mxu0
        %v847 = vpop.f32.mrb[0].mxu0
        %v848 = vadd.f32 %v608, %v847
        %v849 = vpop.f32.mrb[0].mxu0
        %850 = vmatprep.mubr.bf16.mxu0 %v536
        %851 = vmatmul.mubr.bf16.gmra.mrb[0].mxu0 %v535
        %v852 = vpop.f32.mrb[0].mxu0
        %v853 = vadd.f32 %v608, %v852
        %v854 = vpop.f32.mrb[0].mxu0
        %v855 = vpop.f32.mrb[0].mxu0
        %v856 = vadd.f32 %v608, %v855
        %v857 = vpop.f32.mrb[0].mxu0
        %858 = vmatprep.mubr.bf16.mxu0 %v538
        %859 = vmatmul.mubr.bf16.gmra.mrb[0].mxu0 %v537
        %v860 = vpop.f32.mrb[0].mxu0
        %v861 = vadd.f32 %v608, %v860
        %v862 = vpop.f32.mrb[0].mxu0
        %v863 = vpop.f32.mrb[0].mxu0
        %v864 = vadd.f32 %v608, %v863
        %v865 = vpop.f32.mrb[0].mxu0
        %866 = vdwg.mxu0
        %v867 = vmax.f32 %v741, 0.0
        %v868 = vmax.f32 %v744, 0.0
        %v869 = vmax.f32 %v749, 0.0
        %v870 = vmax.f32 %v752, 0.0
        %v871 = vmax.f32 %v757, 0.0
        %v872 = vmax.f32 %v760, 0.0
        %v873 = vmax.f32 %v765, 0.0
        %v874 = vmax.f32 %v768, 0.0
        %v875 = vmax.f32 %v773, 0.0
        %v876 = vmax.f32 %v776, 0.0
        %v877 = vmax.f32 %v781, 0.0
        %v878 = vmax.f32 %v784, 0.0
        %v879 = vmax.f32 %v789, 0.0
        %v880 = vmax.f32 %v792, 0.0
        %v881 = vmax.f32 %v797, 0.0
        %v882 = vmax.f32 %v800, 0.0
        %v883 = vmax.f32 %v805, 0.0
        %v884 = vmax.f32 %v808, 0.0
        %v885 = vmax.f32 %v813, 0.0
        %v886 = vmax.f32 %v816, 0.0
        %v887 = vmax.f32 %v821, 0.0
        %v888 = vmax.f32 %v824, 0.0
        %v889 = vmax.f32 %v829, 0.0
        %v890 = vmax.f32 %v832, 0.0
        %v891 = vmax.f32 %v837, 0.0
        %v892 = vmax.f32 %v840, 0.0
        %v893 = vmax.f32 %v845, 0.0
        %v894 = vmax.f32 %v848, 0.0
        %v895 = vmax.f32 %v853, 0.0
        %v896 = vmax.f32 %v856, 0.0
        %v897 = vmax.f32 %v861, 0.0
        %v898 = vmax.f32 %v864, 0.0
        %v899 = vpack.c.bf16 %v868, %v867
        %v900 = vpack.c.bf16 %v870, %v869
        %v901 = vpack.c.bf16 %v872, %v871
        %v902 = vpack.c.bf16 %v874, %v873
        %v903 = vpack.c.bf16 %v876, %v875
        %v904 = vpack.c.bf16 %v878, %v877
        %v905 = vpack.c.bf16 %v880, %v879
        %v906 = vpack.c.bf16 %v882, %v881
        %v907 = vpack.c.bf16 %v884, %v883
        %v908 = vpack.c.bf16 %v886, %v885
        %v909 = vpack.c.bf16 %v888, %v887
        %v910 = vpack.c.bf16 %v890, %v889
        %v911 = vpack.c.bf16 %v892, %v891
        %v912 = vpack.c.bf16 %v894, %v893
        %v913 = vpack.c.bf16 %v896, %v895
        %v914 = vpack.c.bf16 %v898, %v897
        %v915 = vld [vmem:[%s4] sm:$0xf]
        %v916 = vld [vmem:[%s4 + $0x4] sm:$0xf]
        %v917 = vld [vmem:[%s4 + $0x8] sm:$0xf]
        %v918 = vld [vmem:[%s4 + $0xc] sm:$0xf]
        %v919 = vld [vmem:[%s4 + $0x10] sm:$0xf]
        %v920 = vld [vmem:[%s4 + $0x14] sm:$0xf]
        %v921 = vld [vmem:[%s4 + $0x18] sm:$0xf]
        %v922 = vld [vmem:[%s4 + $0x1c] sm:$0xf]
        %v923 = vld [vmem:[%s4 + $0x20] sm:$0xf]
        %v924 = vld [vmem:[%s4 + $0x24] sm:$0xf]
        %v925 = vld [vmem:[%s4 + $0x28] sm:$0xf]
        %v926 = vld [vmem:[%s4 + $0x2c] sm:$0xf]
        %v927 = vld [vmem:[%s4 + $0x30] sm:$0xf]
        %v928 = vld [vmem:[%s4 + $0x34] sm:$0xf]
        %v929 = vld [vmem:[%s4 + $0x38] sm:$0xf]
        %v930 = vld [vmem:[%s4 + $0x3c] sm:$0xf]
        %v931 = vld [vmem:[%s5] sm:$0x1]
        %v933 = vlaneseq
        %v934 = vshrl.u32 %v933, 7
        %v935 = vsub.s32 0, %v934
        %v936 = vrot.slane %v931, %v935
        %v954 = vunpack.c.l.b16 %v915
        %v955 = vunpack.c.l.b16 %v916
        %v956 = vunpack.c.l.b16 %v917
        %v957 = vunpack.c.l.b16 %v918
        %v958 = vunpack.c.l.b16 %v919
        %v959 = vunpack.c.l.b16 %v920
        %v960 = vunpack.c.l.b16 %v921
        %v961 = vunpack.c.l.b16 %v922
        %v962 = vunpack.c.l.b16 %v923
        %v963 = vunpack.c.l.b16 %v924
        %v964 = vunpack.c.l.b16 %v925
        %v965 = vunpack.c.l.b16 %v926
        %v966 = vunpack.c.l.b16 %v927
        %v967 = vunpack.c.l.b16 %v928
        %v968 = vunpack.c.l.b16 %v929
        %v969 = vunpack.c.l.b16 %v930
        %v970 = vpack.c.b16 %v955, %v954
        %v971 = vpack.c.b16 %v957, %v956
        %v972 = vpack.c.b16 %v959, %v958
        %v973 = vpack.c.b16 %v961, %v960
        %v974 = vpack.c.b16 %v963, %v962
        %v975 = vpack.c.b16 %v965, %v964
        %v976 = vpack.c.b16 %v967, %v966
        %v977 = vpack.c.b16 %v969, %v968
        %986 = vmatprep.subr.bf16.mxu0 0
        %987 = vmatpush1.bf16.msra.mxu0 %v970
        %988 = vmatprep.subr.bf16.mxu0 0
        %989 = vmatpush1.bf16.msra.mxu0 %v971
        %990 = vmatprep.subr.bf16.mxu0 0
        %991 = vmatpush1.bf16.msra.mxu0 %v972
        %992 = vmatprep.subr.bf16.mxu0 0
        %993 = vmatpush1.bf16.msra.mxu0 %v973
        %994 = vmatprep.subr.bf16.mxu0 0
        %995 = vmatpush1.bf16.msra.mxu0 %v974
        %996 = vmatprep.subr.bf16.mxu0 0
        %997 = vmatpush1.bf16.msra.mxu0 %v975
        %998 = vmatprep.subr.bf16.mxu0 0
        %999 = vmatpush1.bf16.msra.mxu0 %v976
        %1000 = vmatprep.subr.bf16.mxu0 0
        %1001 = vmatpush1.bf16.msra.mxu0 %v977
        %1002 = vmatprep.subr.bf16.mxu0 0
        %1003 = vmatpush1.bf16.msra.mxu0 0
        %1004 = vmatprep.subr.bf16.mxu0 0
        %1005 = vmatpush1.bf16.msra.mxu0 0
        %1006 = vmatprep.subr.bf16.mxu0 0
        %1007 = vmatpush1.bf16.msra.mxu0 0
        %1008 = vmatprep.subr.bf16.mxu0 0
        %1009 = vmatpush1.bf16.msra.mxu0 0
        %1010 = vmatprep.subr.bf16.mxu0 0
        %1011 = vmatpush1.bf16.msra.mxu0 0
        %1012 = vmatprep.subr.bf16.mxu0 0
        %1013 = vmatpush1.bf16.msra.mxu0 0
        %1014 = vmatprep.subr.bf16.mxu0 0
        %1015 = vmatpush1.bf16.msra.mxu0 0
        %1016 = vmatprep.subr.bf16.mxu0 0
        %1017 = vmatpush1.bf16.msra.mxu0 0
        %1018 = vmatprep.mubr.bf16.mxu0 0
        %1019 = vmatmul.mubr.bf16.gmra.mrb[0].mxu0 %v899
        %v1020 = vpop.f32.mrb[0].mxu0
        %v1021 = vadd.f32 %v936, %v1020
        %v1022 = vpop.f32.mrb[0].mxu0
        %v1023 = vpop.f32.mrb[0].mxu0
        %v1024 = vadd.f32 %v936, %v1023
        %v1025 = vpop.f32.mrb[0].mxu0
        %1026 = vmatprep.mubr.bf16.mxu0 0
        %1027 = vmatmul.mubr.bf16.gmra.mrb[0].mxu0 %v900
        %v1028 = vpop.f32.mrb[0].mxu0
        %v1029 = vadd.f32 %v936, %v1028
        %v1030 = vpop.f32.mrb[0].mxu0
        %v1031 = vpop.f32.mrb[0].mxu0
        %v1032 = vadd.f32 %v936, %v1031
        %v1033 = vpop.f32.mrb[0].mxu0
        %1034 = vmatprep.mubr.bf16.mxu0 0
        %1035 = vmatmul.mubr.bf16.gmra.mrb[0].mxu0 %v901
        %v1036 = vpop.f32.mrb[0].mxu0
        %v1037 = vadd.f32 %v936, %v1036
        %v1038 = vpop.f32.mrb[0].mxu0
        %v1039 = vpop.f32.mrb[0].mxu0
        %v1040 = vadd.f32 %v936, %v1039
        %v1041 = vpop.f32.mrb[0].mxu0
        %1042 = vmatprep.mubr.bf16.mxu0 0
        %1043 = vmatmul.mubr.bf16.gmra.mrb[0].mxu0 %v902
        %v1044 = vpop.f32.mrb[0].mxu0
        %v1045 = vadd.f32 %v936, %v1044
        %v1046 = vpop.f32.mrb[0].mxu0
        %v1047 = vpop.f32.mrb[0].mxu0
        %v1048 = vadd.f32 %v936, %v1047
        %v1049 = vpop.f32.mrb[0].mxu0
        %1050 = vmatprep.mubr.bf16.mxu0 0
        %1051 = vmatmul.mubr.bf16.gmra.mrb[0].mxu0 %v903
        %v1052 = vpop.f32.mrb[0].mxu0
        %v1053 = vadd.f32 %v936, %v1052
        %v1054 = vpop.f32.mrb[0].mxu0
        %v1055 = vpop.f32.mrb[0].mxu0
        %v1056 = vadd.f32 %v936, %v1055
        %v1057 = vpop.f32.mrb[0].mxu0
        %1058 = vmatprep.mubr.bf16.mxu0 0
        %1059 = vmatmul.mubr.bf16.gmra.mrb[0].mxu0 %v904
        %v1060 = vpop.f32.mrb[0].mxu0
        %v1061 = vadd.f32 %v936, %v1060
        %v1062 = vpop.f32.mrb[0].mxu0
        %v1063 = vpop.f32.mrb[0].mxu0
        %v1064 = vadd.f32 %v936, %v1063
        %v1065 = vpop.f32.mrb[0].mxu0
        %1066 = vmatprep.mubr.bf16.mxu0 0
        %1067 = vmatmul.mubr.bf16.gmra.mrb[0].mxu0 %v905
        %v1068 = vpop.f32.mrb[0].mxu0
        %v1069 = vadd.f32 %v936, %v1068
        %v1070 = vpop.f32.mrb[0].mxu0
        %v1071 = vpop.f32.mrb[0].mxu0
        %v1072 = vadd.f32 %v936, %v1071
        %v1073 = vpop.f32.mrb[0].mxu0
        %1074 = vmatprep.mubr.bf16.mxu0 0
        %1075 = vmatmul.mubr.bf16.gmra.mrb[0].mxu0 %v906
        %v1076 = vpop.f32.mrb[0].mxu0
        %v1077 = vadd.f32 %v936, %v1076
        %v1078 = vpop.f32.mrb[0].mxu0
        %v1079 = vpop.f32.mrb[0].mxu0
        %v1080 = vadd.f32 %v936, %v1079
        %v1081 = vpop.f32.mrb[0].mxu0
        %1082 = vmatprep.mubr.bf16.mxu0 0
        %1083 = vmatmul.mubr.bf16.gmra.mrb[0].mxu0 %v907
        %v1084 = vpop.f32.mrb[0].mxu0
        %v1085 = vadd.f32 %v936, %v1084
        %v1086 = vpop.f32.mrb[0].mxu0
        %v1087 = vpop.f32.mrb[0].mxu0
        %v1088 = vadd.f32 %v936, %v1087
        %v1089 = vpop.f32.mrb[0].mxu0
        %1090 = vmatprep.mubr.bf16.mxu0 0
        %1091 = vmatmul.mubr.bf16.gmra.mrb[0].mxu0 %v908
        %v1092 = vpop.f32.mrb[0].mxu0
        %v1093 = vadd.f32 %v936, %v1092
        %v1094 = vpop.f32.mrb[0].mxu0
        %v1095 = vpop.f32.mrb[0].mxu0
        %v1096 = vadd.f32 %v936, %v1095
        %v1097 = vpop.f32.mrb[0].mxu0
        %1098 = vmatprep.mubr.bf16.mxu0 0
        %1099 = vmatmul.mubr.bf16.gmra.mrb[0].mxu0 %v909
        %v1100 = vpop.f32.mrb[0].mxu0
        %v1101 = vadd.f32 %v936, %v1100
        %v1102 = vpop.f32.mrb[0].mxu0
        %v1103 = vpop.f32.mrb[0].mxu0
        %v1104 = vadd.f32 %v936, %v1103
        %v1105 = vpop.f32.mrb[0].mxu0
        %1106 = vmatprep.mubr.bf16.mxu0 0
        %1107 = vmatmul.mubr.bf16.gmra.mrb[0].mxu0 %v910
        %v1108 = vpop.f32.mrb[0].mxu0
        %v1109 = vadd.f32 %v936, %v1108
        %v1110 = vpop.f32.mrb[0].mxu0
        %v1111 = vpop.f32.mrb[0].mxu0
        %v1112 = vadd.f32 %v936, %v1111
        %v1113 = vpop.f32.mrb[0].mxu0
        %1114 = vmatprep.mubr.bf16.mxu0 0
        %1115 = vmatmul.mubr.bf16.gmra.mrb[0].mxu0 %v911
        %v1116 = vpop.f32.mrb[0].mxu0
        %v1117 = vadd.f32 %v936, %v1116
        %v1118 = vpop.f32.mrb[0].mxu0
        %v1119 = vpop.f32.mrb[0].mxu0
        %v1120 = vadd.f32 %v936, %v1119
        %v1121 = vpop.f32.mrb[0].mxu0
        %1122 = vmatprep.mubr.bf16.mxu0 0
        %1123 = vmatmul.mubr.bf16.gmra.mrb[0].mxu0 %v912
        %v1124 = vpop.f32.mrb[0].mxu0
        %v1125 = vadd.f32 %v936, %v1124
        %v1126 = vpop.f32.mrb[0].mxu0
        %v1127 = vpop.f32.mrb[0].mxu0
        %v1128 = vadd.f32 %v936, %v1127
        %v1129 = vpop.f32.mrb[0].mxu0
        %1130 = vmatprep.mubr.bf16.mxu0 0
        %1131 = vmatmul.mubr.bf16.gmra.mrb[0].mxu0 %v913
        %v1132 = vpop.f32.mrb[0].mxu0
        %v1133 = vadd.f32 %v936, %v1132
        %v1134 = vpop.f32.mrb[0].mxu0
        %v1135 = vpop.f32.mrb[0].mxu0
        %v1136 = vadd.f32 %v936, %v1135
        %v1137 = vpop.f32.mrb[0].mxu0
        %1138 = vmatprep.mubr.bf16.mxu0 0
        %1139 = vmatmul.mubr.bf16.gmra.mrb[0].mxu0 %v914
        %v1140 = vpop.f32.mrb[0].mxu0
        %v1141 = vadd.f32 %v936, %v1140
        %v1142 = vpop.f32.mrb[0].mxu0
        %v1143 = vpop.f32.mrb[0].mxu0
        %v1144 = vadd.f32 %v936, %v1143
        %v1145 = vpop.f32.mrb[0].mxu0
        %1146 = vdwg.mxu0
        %v1147 = vmul.f32 %v1021, 0.5
        %v1148 = vmul.f32 %v1024, 0.5
        %v1149 = vmul.f32 %v1029, 0.5
        %v1150 = vmul.f32 %v1032, 0.5
        %v1151 = vmul.f32 %v1037, 0.5
        %v1152 = vmul.f32 %v1040, 0.5
        %v1153 = vmul.f32 %v1045, 0.5
        %v1154 = vmul.f32 %v1048, 0.5
        %v1155 = vmul.f32 %v1053, 0.5
        %v1156 = vmul.f32 %v1056, 0.5
        %v1157 = vmul.f32 %v1061, 0.5
        %v1158 = vmul.f32 %v1064, 0.5
        %v1159 = vmul.f32 %v1069, 0.5
        %v1160 = vmul.f32 %v1072, 0.5
        %v1161 = vmul.f32 %v1077, 0.5
        %v1162 = vmul.f32 %v1080, 0.5
        %v1163 = vmul.f32 %v1085, 0.5
        %v1164 = vmul.f32 %v1088, 0.5
        %v1165 = vmul.f32 %v1093, 0.5
        %v1166 = vmul.f32 %v1096, 0.5
        %v1167 = vmul.f32 %v1101, 0.5
        %v1168 = vmul.f32 %v1104, 0.5
        %v1169 = vmul.f32 %v1109, 0.5
        %v1170 = vmul.f32 %v1112, 0.5
        %v1171 = vmul.f32 %v1117, 0.5
        %v1172 = vmul.f32 %v1120, 0.5
        %v1173 = vmul.f32 %v1125, 0.5
        %v1174 = vmul.f32 %v1128, 0.5
        %v1175 = vmul.f32 %v1133, 0.5
        %v1176 = vmul.f32 %v1136, 0.5
        %v1177 = vmul.f32 %v1141, 0.5
        %v1178 = vmul.f32 %v1144, 0.5
        %v1179 = vmul.f32 %v1147, 1.442695
        %v1180 = vpow.pop %v1179
        %v1181 = vmul.f32 %v1148, 1.442695
        %v1182 = vpow.pop %v1181
        %v1183 = vmul.f32 %v1149, 1.442695
        %v1184 = vpow.pop %v1183
        %v1185 = vmul.f32 %v1150, 1.442695
        %v1186 = vpow.pop %v1185
        %v1187 = vmul.f32 %v1151, 1.442695
        %v1188 = vpow.pop %v1187
        %v1189 = vmul.f32 %v1152, 1.442695
        %v1190 = vpow.pop %v1189
        %v1191 = vmul.f32 %v1153, 1.442695
        %v1192 = vpow.pop %v1191
        %v1193 = vmul.f32 %v1154, 1.442695
        %v1194 = vpow.pop %v1193
        %v1195 = vmul.f32 %v1155, 1.442695
        %v1196 = vpow.pop %v1195
        %v1197 = vmul.f32 %v1156, 1.442695
        %v1198 = vpow.pop %v1197
        %v1199 = vmul.f32 %v1157, 1.442695
        %v1200 = vpow.pop %v1199
        %v1201 = vmul.f32 %v1158, 1.442695
        %v1202 = vpow.pop %v1201
        %v1203 = vmul.f32 %v1159, 1.442695
        %v1204 = vpow.pop %v1203
        %v1205 = vmul.f32 %v1160, 1.442695
        %v1206 = vpow.pop %v1205
        %v1207 = vmul.f32 %v1161, 1.442695
        %v1208 = vpow.pop %v1207
        %v1209 = vmul.f32 %v1162, 1.442695
        %v1210 = vpow.pop %v1209
        %v1211 = vmul.f32 %v1163, 1.442695
        %v1212 = vpow.pop %v1211
        %v1213 = vmul.f32 %v1164, 1.442695
        %v1214 = vpow.pop %v1213
        %v1215 = vmul.f32 %v1165, 1.442695
        %v1216 = vpow.pop %v1215
        %v1217 = vmul.f32 %v1166, 1.442695
        %v1218 = vpow.pop %v1217
        %v1219 = vmul.f32 %v1167, 1.442695
        %v1220 = vpow.pop %v1219
        %v1221 = vmul.f32 %v1168, 1.442695
        %v1222 = vpow.pop %v1221
        %v1223 = vmul.f32 %v1169, 1.442695
        %v1224 = vpow.pop %v1223
        %v1225 = vmul.f32 %v1170, 1.442695
        %v1226 = vpow.pop %v1225
        %v1227 = vmul.f32 %v1171, 1.442695
        %v1228 = vpow.pop %v1227
        %v1229 = vmul.f32 %v1172, 1.442695
        %v1230 = vpow.pop %v1229
        %v1231 = vmul.f32 %v1173, 1.442695
        %v1232 = vpow.pop %v1231
        %v1233 = vmul.f32 %v1174, 1.442695
        %v1234 = vpow.pop %v1233
        %v1235 = vmul.f32 %v1175, 1.442695
        %v1236 = vpow.pop %v1235
        %v1237 = vmul.f32 %v1176, 1.442695
        %v1238 = vpow.pop %v1237
        %v1239 = vmul.f32 %v1177, 1.442695
        %v1240 = vpow.pop %v1239
        %v1241 = vmul.f32 %v1178, 1.442695
        %v1242 = vpow.pop %v1241
        %1275 = vrot.lane.b32.xlu0 %v1180, 96
        %v1276 = vpop.permute.xlu0 %1275
        %1277 = vrot.lane.b32.xlu0 %v1182, 96
        %v1278 = vpop.permute.xlu0 %1277
        %1279 = vrot.lane.b32.xlu0 %v1184, 96
        %v1280 = vpop.permute.xlu0 %1279
        %1281 = vrot.lane.b32.xlu0 %v1186, 96
        %v1282 = vpop.permute.xlu0 %1281
        %1283 = vrot.lane.b32.xlu0 %v1188, 96
        %v1284 = vpop.permute.xlu0 %1283
        %1285 = vrot.lane.b32.xlu0 %v1190, 96
        %v1286 = vpop.permute.xlu0 %1285
        %1287 = vrot.lane.b32.xlu0 %v1192, 96
        %v1288 = vpop.permute.xlu0 %1287
        %1289 = vrot.lane.b32.xlu0 %v1194, 96
        %v1290 = vpop.permute.xlu0 %1289
        %1291 = vrot.lane.b32.xlu0 %v1196, 96
        %v1292 = vpop.permute.xlu0 %1291
        %1293 = vrot.lane.b32.xlu0 %v1198, 96
        %v1294 = vpop.permute.xlu0 %1293
        %1295 = vrot.lane.b32.xlu0 %v1200, 96
        %v1296 = vpop.permute.xlu0 %1295
        %1297 = vrot.lane.b32.xlu0 %v1202, 96
        %v1298 = vpop.permute.xlu0 %1297
        %1299 = vrot.lane.b32.xlu0 %v1204, 96
        %v1300 = vpop.permute.xlu0 %1299
        %1301 = vrot.lane.b32.xlu0 %v1206, 96
        %v1302 = vpop.permute.xlu0 %1301
        %1303 = vrot.lane.b32.xlu0 %v1208, 96
        %v1304 = vpop.permute.xlu0 %1303
        %1305 = vrot.lane.b32.xlu0 %v1210, 96
        %v1306 = vpop.permute.xlu0 %1305
        %1307 = vrot.lane.b32.xlu0 %v1212, 96
        %v1308 = vpop.permute.xlu0 %1307
        %1309 = vrot.lane.b32.xlu0 %v1214, 96
        %v1310 = vpop.permute.xlu0 %1309
        %1311 = vrot.lane.b32.xlu0 %v1216, 96
        %v1312 = vpop.permute.xlu0 %1311
        %1313 = vrot.lane.b32.xlu0 %v1218, 96
        %v1314 = vpop.permute.xlu0 %1313
        %1315 = vrot.lane.b32.xlu0 %v1220, 96
        %v1316 = vpop.permute.xlu0 %1315
        %1317 = vrot.lane.b32.xlu0 %v1222, 96
        %v1318 = vpop.permute.xlu0 %1317
        %1319 = vrot.lane.b32.xlu0 %v1224, 96
        %v1320 = vpop.permute.xlu0 %1319
        %1321 = vrot.lane.b32.xlu0 %v1226, 96
        %v1322 = vpop.permute.xlu0 %1321
        %1323 = vrot.lane.b32.xlu0 %v1228, 96
        %v1324 = vpop.permute.xlu0 %1323
        %1325 = vrot.lane.b32.xlu0 %v1230, 96
        %v1326 = vpop.permute.xlu0 %1325
        %1327 = vrot.lane.b32.xlu0 %v1232, 96
        %v1328 = vpop.permute.xlu0 %1327
        %1329 = vrot.lane.b32.xlu0 %v1234, 96
        %v1330 = vpop.permute.xlu0 %1329
        %1331 = vrot.lane.b32.xlu0 %v1236, 96
        %v1332 = vpop.permute.xlu0 %1331
        %1333 = vrot.lane.b32.xlu0 %v1238, 96
        %v1334 = vpop.permute.xlu0 %1333
        %1335 = vrot.lane.b32.xlu0 %v1240, 96
        %v1336 = vpop.permute.xlu0 %1335
        %1337 = vrot.lane.b32.xlu0 %v1242, 96
        %v1338 = vpop.permute.xlu0 %1337
        %v1371 = vmul.f32 %v539, %v1276
        %v1372 = vmul.f32 %v540, %v1278
        %v1373 = vmul.f32 %v541, %v1280
        %v1374 = vmul.f32 %v542, %v1282
        %v1375 = vmul.f32 %v543, %v1284
        %v1376 = vmul.f32 %v544, %v1286
        %v1377 = vmul.f32 %v545, %v1288
        %v1378 = vmul.f32 %v546, %v1290
        %v1379 = vmul.f32 %v547, %v1292
        %v1380 = vmul.f32 %v548, %v1294
        %v1381 = vmul.f32 %v549, %v1296
        %v1382 = vmul.f32 %v550, %v1298
        %v1383 = vmul.f32 %v551, %v1300
        %v1384 = vmul.f32 %v552, %v1302
        %v1385 = vmul.f32 %v553, %v1304
        %v1386 = vmul.f32 %v554, %v1306
        %v1387 = vmul.f32 %v555, %v1308
        %v1388 = vmul.f32 %v556, %v1310
        %v1389 = vmul.f32 %v557, %v1312
        %v1390 = vmul.f32 %v558, %v1314
        %v1391 = vmul.f32 %v559, %v1316
        %v1392 = vmul.f32 %v560, %v1318
        %v1393 = vmul.f32 %v561, %v1320
        %v1394 = vmul.f32 %v562, %v1322
        %v1395 = vmul.f32 %v563, %v1324
        %v1396 = vmul.f32 %v564, %v1326
        %v1397 = vmul.f32 %v565, %v1328
        %v1398 = vmul.f32 %v566, %v1330
        %v1399 = vmul.f32 %v567, %v1332
        %v1400 = vmul.f32 %v568, %v1334
        %v1401 = vmul.f32 %v569, %v1336
        %v1402 = vmul.f32 %v570, %v1338
        %v1403 = vadd.f32 %v1021, %v1371
        %v1404 = vadd.f32 %v1024, %v1372
        %v1405 = vadd.f32 %v1029, %v1373
        %v1406 = vadd.f32 %v1032, %v1374
        %v1407 = vadd.f32 %v1037, %v1375
        %v1408 = vadd.f32 %v1040, %v1376
        %v1409 = vadd.f32 %v1045, %v1377
        %v1410 = vadd.f32 %v1048, %v1378
        %v1411 = vadd.f32 %v1053, %v1379
        %v1412 = vadd.f32 %v1056, %v1380
        %v1413 = vadd.f32 %v1061, %v1381
        %v1414 = vadd.f32 %v1064, %v1382
        %v1415 = vadd.f32 %v1069, %v1383
        %v1416 = vadd.f32 %v1072, %v1384
        %v1417 = vadd.f32 %v1077, %v1385
        %v1418 = vadd.f32 %v1080, %v1386
        %v1419 = vadd.f32 %v1085, %v1387
        %v1420 = vadd.f32 %v1088, %v1388
        %v1421 = vadd.f32 %v1093, %v1389
        %v1422 = vadd.f32 %v1096, %v1390
        %v1423 = vadd.f32 %v1101, %v1391
        %v1424 = vadd.f32 %v1104, %v1392
        %v1425 = vadd.f32 %v1109, %v1393
        %v1426 = vadd.f32 %v1112, %v1394
        %v1427 = vadd.f32 %v1117, %v1395
        %v1428 = vadd.f32 %v1120, %v1396
        %v1429 = vadd.f32 %v1125, %v1397
        %v1430 = vadd.f32 %v1128, %v1398
        %v1431 = vadd.f32 %v1133, %v1399
        %v1432 = vadd.f32 %v1136, %v1400
        %v1433 = vadd.f32 %v1141, %v1401
        %v1434 = vadd.f32 %v1144, %v1402
        %v1435 = vpack.c.bf16 %v1404, %v1403
        %v1436 = vpack.c.bf16 %v1406, %v1405
        %v1437 = vpack.c.bf16 %v1408, %v1407
        %v1438 = vpack.c.bf16 %v1410, %v1409
        %v1439 = vpack.c.bf16 %v1412, %v1411
        %v1440 = vpack.c.bf16 %v1414, %v1413
        %v1441 = vpack.c.bf16 %v1416, %v1415
        %v1442 = vpack.c.bf16 %v1418, %v1417
        %v1443 = vpack.c.bf16 %v1420, %v1419
        %v1444 = vpack.c.bf16 %v1422, %v1421
        %v1445 = vpack.c.bf16 %v1424, %v1423
        %v1446 = vpack.c.bf16 %v1426, %v1425
        %v1447 = vpack.c.bf16 %v1428, %v1427
        %v1448 = vpack.c.bf16 %v1430, %v1429
        %v1449 = vpack.c.bf16 %v1432, %v1431
        %v1450 = vpack.c.bf16 %v1434, %v1433
        %v1451 = vld [vmem:[%s6] sm:$0xf]
        %v1452 = vld [vmem:[%s6 + $0x4] sm:$0xf]
        %v1453 = vld [vmem:[%s6 + $0x8] sm:$0xf]
        %v1454 = vld [vmem:[%s6 + $0xc] sm:$0xf]
        %v1455 = vld [vmem:[%s7] sm:$0x1]
        %v1457 = vlaneseq
        %v1458 = vshrl.u32 %v1457, 7
        %v1459 = vsub.s32 0, %v1458
        %v1460 = vrot.slane %v1455, %v1459
        %v1466 = vunpack.c.l.b16 %v1451
        %v1467 = vunpack.c.l.b16 %v1452
        %v1468 = vunpack.c.l.b16 %v1453
        %v1469 = vunpack.c.l.b16 %v1454
        %v1470 = vpack.c.b16 %v1467, %v1466
        %v1471 = vpack.c.b16 %v1469, %v1468
        %vm1474 = vcmask 261120
        %v1476 = vsel %vm1474, %v1435, 0
        %v1479 = vsel %vm1474, %v1436, 0
        %v1482 = vsel %vm1474, %v1437, 0
        %v1485 = vsel %vm1474, %v1438, 0
        %v1488 = vsel %vm1474, %v1439, 0
        %v1491 = vsel %vm1474, %v1440, 0
        %v1494 = vsel %vm1474, %v1441, 0
        %v1497 = vsel %vm1474, %v1442, 0
        %v1500 = vsel %vm1474, %v1443, 0
        %v1503 = vsel %vm1474, %v1444, 0
        %v1506 = vsel %vm1474, %v1445, 0
        %v1509 = vsel %vm1474, %v1446, 0
        %v1512 = vsel %vm1474, %v1447, 0
        %v1515 = vsel %vm1474, %v1448, 0
        %v1518 = vsel %vm1474, %v1449, 0
        %v1521 = vsel %vm1474, %v1450, 0
        %1523 = vmatprep.subr.bf16.mxu0 0
        %1524 = vmatpush1.bf16.msra.mxu0 %v1470
        %1525 = vmatprep.subr.bf16.mxu0 0
        %1526 = vmatpush1.bf16.msra.mxu0 %v1471
        %1527 = vmatprep.subr.bf16.mxu0 0
        %1528 = vmatpush1.bf16.msra.mxu0 0
        %1529 = vmatprep.subr.bf16.mxu0 0
        %1530 = vmatpush1.bf16.msra.mxu0 0
        %1531 = vmatprep.subr.bf16.mxu0 0
        %1532 = vmatpush1.bf16.msra.mxu0 0
        %1533 = vmatprep.subr.bf16.mxu0 0
        %1534 = vmatpush1.bf16.msra.mxu0 0
        %1535 = vmatprep.subr.bf16.mxu0 0
        %1536 = vmatpush1.bf16.msra.mxu0 0
        %1537 = vmatprep.subr.bf16.mxu0 0
        %1538 = vmatpush1.bf16.msra.mxu0 0
        %1539 = vmatprep.subr.bf16.mxu0 0
        %1540 = vmatpush1.bf16.msra.mxu0 0
        %1541 = vmatprep.subr.bf16.mxu0 0
        %1542 = vmatpush1.bf16.msra.mxu0 0
        %1543 = vmatprep.subr.bf16.mxu0 0
        %1544 = vmatpush1.bf16.msra.mxu0 0
        %1545 = vmatprep.subr.bf16.mxu0 0
        %1546 = vmatpush1.bf16.msra.mxu0 0
        %1547 = vmatprep.subr.bf16.mxu0 0
        %1548 = vmatpush1.bf16.msra.mxu0 0
        %1549 = vmatprep.subr.bf16.mxu0 0
        %1550 = vmatpush1.bf16.msra.mxu0 0
        %1551 = vmatprep.subr.bf16.mxu0 0
        %1552 = vmatpush1.bf16.msra.mxu0 0
        %1553 = vmatprep.subr.bf16.mxu0 0
        %1554 = vmatpush1.bf16.msra.mxu0 0
        %1555 = vmatprep.mubr.bf16.mxu0 0
        %1556 = vmatmul.mubr.bf16.gmra.mrb[0].mxu0 %v1476
        %v1557 = vpop.f32.mrb[0].mxu0
        %v1558 = vadd.f32 %v1460, %v1557
        %v1559 = vpop.f32.mrb[0].mxu0
        %v1560 = vpop.f32.mrb[0].mxu0
        %v1561 = vadd.f32 %v1460, %v1560
        %v1562 = vpop.f32.mrb[0].mxu0
        %1563 = vmatprep.mubr.bf16.mxu0 0
        %1564 = vmatmul.mubr.bf16.gmra.mrb[0].mxu0 %v1479
        %v1565 = vpop.f32.mrb[0].mxu0
        %v1566 = vadd.f32 %v1460, %v1565
        %v1567 = vpop.f32.mrb[0].mxu0
        %v1568 = vpop.f32.mrb[0].mxu0
        %v1569 = vadd.f32 %v1460, %v1568
        %v1570 = vpop.f32.mrb[0].mxu0
        %1571 = vmatprep.mubr.bf16.mxu0 0
        %1572 = vmatmul.mubr.bf16.gmra.mrb[0].mxu0 %v1482
        %v1573 = vpop.f32.mrb[0].mxu0
        %v1574 = vadd.f32 %v1460, %v1573
        %v1575 = vpop.f32.mrb[0].mxu0
        %v1576 = vpop.f32.mrb[0].mxu0
        %v1577 = vadd.f32 %v1460, %v1576
        %v1578 = vpop.f32.mrb[0].mxu0
        %1579 = vmatprep.mubr.bf16.mxu0 0
        %1580 = vmatmul.mubr.bf16.gmra.mrb[0].mxu0 %v1485
        %v1581 = vpop.f32.mrb[0].mxu0
        %v1582 = vadd.f32 %v1460, %v1581
        %v1583 = vpop.f32.mrb[0].mxu0
        %v1584 = vpop.f32.mrb[0].mxu0
        %v1585 = vadd.f32 %v1460, %v1584
        %v1586 = vpop.f32.mrb[0].mxu0
        %1587 = vmatprep.mubr.bf16.mxu0 0
        %1588 = vmatmul.mubr.bf16.gmra.mrb[0].mxu0 %v1488
        %v1589 = vpop.f32.mrb[0].mxu0
        %v1590 = vadd.f32 %v1460, %v1589
        %v1591 = vpop.f32.mrb[0].mxu0
        %v1592 = vpop.f32.mrb[0].mxu0
        %v1593 = vadd.f32 %v1460, %v1592
        %v1594 = vpop.f32.mrb[0].mxu0
        %1595 = vmatprep.mubr.bf16.mxu0 0
        %1596 = vmatmul.mubr.bf16.gmra.mrb[0].mxu0 %v1491
        %v1597 = vpop.f32.mrb[0].mxu0
        %v1598 = vadd.f32 %v1460, %v1597
        %v1599 = vpop.f32.mrb[0].mxu0
        %v1600 = vpop.f32.mrb[0].mxu0
        %v1601 = vadd.f32 %v1460, %v1600
        %v1602 = vpop.f32.mrb[0].mxu0
        %1603 = vmatprep.mubr.bf16.mxu0 0
        %1604 = vmatmul.mubr.bf16.gmra.mrb[0].mxu0 %v1494
        %v1605 = vpop.f32.mrb[0].mxu0
        %v1606 = vadd.f32 %v1460, %v1605
        %v1607 = vpop.f32.mrb[0].mxu0
        %v1608 = vpop.f32.mrb[0].mxu0
        %v1609 = vadd.f32 %v1460, %v1608
        %v1610 = vpop.f32.mrb[0].mxu0
        %1611 = vmatprep.mubr.bf16.mxu0 0
        %1612 = vmatmul.mubr.bf16.gmra.mrb[0].mxu0 %v1497
        %v1613 = vpop.f32.mrb[0].mxu0
        %v1614 = vadd.f32 %v1460, %v1613
        %v1615 = vpop.f32.mrb[0].mxu0
        %v1616 = vpop.f32.mrb[0].mxu0
        %v1617 = vadd.f32 %v1460, %v1616
        %v1618 = vpop.f32.mrb[0].mxu0
        %1619 = vmatprep.mubr.bf16.mxu0 0
        %1620 = vmatmul.mubr.bf16.gmra.mrb[0].mxu0 %v1500
        %v1621 = vpop.f32.mrb[0].mxu0
        %v1622 = vadd.f32 %v1460, %v1621
        %v1623 = vpop.f32.mrb[0].mxu0
        %v1624 = vpop.f32.mrb[0].mxu0
        %v1625 = vadd.f32 %v1460, %v1624
        %v1626 = vpop.f32.mrb[0].mxu0
        %1627 = vmatprep.mubr.bf16.mxu0 0
        %1628 = vmatmul.mubr.bf16.gmra.mrb[0].mxu0 %v1503
        %v1629 = vpop.f32.mrb[0].mxu0
        %v1630 = vadd.f32 %v1460, %v1629
        %v1631 = vpop.f32.mrb[0].mxu0
        %v1632 = vpop.f32.mrb[0].mxu0
        %v1633 = vadd.f32 %v1460, %v1632
        %v1634 = vpop.f32.mrb[0].mxu0
        %1635 = vmatprep.mubr.bf16.mxu0 0
        %1636 = vmatmul.mubr.bf16.gmra.mrb[0].mxu0 %v1506
        %v1637 = vpop.f32.mrb[0].mxu0
        %v1638 = vadd.f32 %v1460, %v1637
        %v1639 = vpop.f32.mrb[0].mxu0
        %v1640 = vpop.f32.mrb[0].mxu0
        %v1641 = vadd.f32 %v1460, %v1640
        %v1642 = vpop.f32.mrb[0].mxu0
        %1643 = vmatprep.mubr.bf16.mxu0 0
        %1644 = vmatmul.mubr.bf16.gmra.mrb[0].mxu0 %v1509
        %v1645 = vpop.f32.mrb[0].mxu0
        %v1646 = vadd.f32 %v1460, %v1645
        %v1647 = vpop.f32.mrb[0].mxu0
        %v1648 = vpop.f32.mrb[0].mxu0
        %v1649 = vadd.f32 %v1460, %v1648
        %v1650 = vpop.f32.mrb[0].mxu0
        %1651 = vmatprep.mubr.bf16.mxu0 0
        %1652 = vmatmul.mubr.bf16.gmra.mrb[0].mxu0 %v1512
        %v1653 = vpop.f32.mrb[0].mxu0
        %v1654 = vadd.f32 %v1460, %v1653
        %v1655 = vpop.f32.mrb[0].mxu0
        %v1656 = vpop.f32.mrb[0].mxu0
        %v1657 = vadd.f32 %v1460, %v1656
        %v1658 = vpop.f32.mrb[0].mxu0
        %1659 = vmatprep.mubr.bf16.mxu0 0
        %1660 = vmatmul.mubr.bf16.gmra.mrb[0].mxu0 %v1515
        %v1661 = vpop.f32.mrb[0].mxu0
        %v1662 = vadd.f32 %v1460, %v1661
        %v1663 = vpop.f32.mrb[0].mxu0
        %v1664 = vpop.f32.mrb[0].mxu0
        %v1665 = vadd.f32 %v1460, %v1664
        %v1666 = vpop.f32.mrb[0].mxu0
        %1667 = vmatprep.mubr.bf16.mxu0 0
        %1668 = vmatmul.mubr.bf16.gmra.mrb[0].mxu0 %v1518
        %v1669 = vpop.f32.mrb[0].mxu0
        %v1670 = vadd.f32 %v1460, %v1669
        %v1671 = vpop.f32.mrb[0].mxu0
        %v1672 = vpop.f32.mrb[0].mxu0
        %v1673 = vadd.f32 %v1460, %v1672
        %v1674 = vpop.f32.mrb[0].mxu0
        %1675 = vmatprep.mubr.bf16.mxu0 0
        %1676 = vmatmul.mubr.bf16.gmra.mrb[0].mxu0 %v1521
        %v1677 = vpop.f32.mrb[0].mxu0
        %v1678 = vadd.f32 %v1460, %v1677
        %v1679 = vpop.f32.mrb[0].mxu0
        %v1680 = vpop.f32.mrb[0].mxu0
        %v1681 = vadd.f32 %v1460, %v1680
        %v1682 = vpop.f32.mrb[0].mxu0
        %1683 = vdwg.mxu0
        %v1684 = vmax.f32 %v1558, 0.0
        %v1685 = vmax.f32 %v1561, 0.0
        %v1686 = vmax.f32 %v1566, 0.0
        %v1687 = vmax.f32 %v1569, 0.0
        %v1688 = vmax.f32 %v1574, 0.0
        %v1689 = vmax.f32 %v1577, 0.0
        %v1690 = vmax.f32 %v1582, 0.0
        %v1691 = vmax.f32 %v1585, 0.0
        %v1692 = vmax.f32 %v1590, 0.0
        %v1693 = vmax.f32 %v1593, 0.0
        %v1694 = vmax.f32 %v1598, 0.0
        %v1695 = vmax.f32 %v1601, 0.0
        %v1696 = vmax.f32 %v1606, 0.0
        %v1697 = vmax.f32 %v1609, 0.0
        %v1698 = vmax.f32 %v1614, 0.0
        %v1699 = vmax.f32 %v1617, 0.0
        %v1700 = vmax.f32 %v1622, 0.0
        %v1701 = vmax.f32 %v1625, 0.0
        %v1702 = vmax.f32 %v1630, 0.0
        %v1703 = vmax.f32 %v1633, 0.0
        %v1704 = vmax.f32 %v1638, 0.0
        %v1705 = vmax.f32 %v1641, 0.0
        %v1706 = vmax.f32 %v1646, 0.0
        %v1707 = vmax.f32 %v1649, 0.0
        %v1708 = vmax.f32 %v1654, 0.0
        %v1709 = vmax.f32 %v1657, 0.0
        %v1710 = vmax.f32 %v1662, 0.0
        %v1711 = vmax.f32 %v1665, 0.0
        %v1712 = vmax.f32 %v1670, 0.0
        %v1713 = vmax.f32 %v1673, 0.0
        %v1714 = vmax.f32 %v1678, 0.0
        %v1715 = vmax.f32 %v1681, 0.0
        %v1716 = vpack.c.bf16 %v1685, %v1684
        %v1717 = vpack.c.bf16 %v1687, %v1686
        %v1718 = vpack.c.bf16 %v1689, %v1688
        %v1719 = vpack.c.bf16 %v1691, %v1690
        %v1720 = vpack.c.bf16 %v1693, %v1692
        %v1721 = vpack.c.bf16 %v1695, %v1694
        %v1722 = vpack.c.bf16 %v1697, %v1696
        %v1723 = vpack.c.bf16 %v1699, %v1698
        %v1724 = vpack.c.bf16 %v1701, %v1700
        %v1725 = vpack.c.bf16 %v1703, %v1702
        %v1726 = vpack.c.bf16 %v1705, %v1704
        %v1727 = vpack.c.bf16 %v1707, %v1706
        %v1728 = vpack.c.bf16 %v1709, %v1708
        %v1729 = vpack.c.bf16 %v1711, %v1710
        %v1730 = vpack.c.bf16 %v1713, %v1712
        %v1731 = vpack.c.bf16 %v1715, %v1714
        %v1732 = vld [vmem:[%s8] sm:$0xff]
        %v1733 = vld [vmem:[%s8 + $0x8] sm:$0xff]
        %v1734 = vld [vmem:[%s8 + $0x10] sm:$0xff]
        %v1735 = vld [vmem:[%s8 + $0x18] sm:$0xff]
        %v1736 = vld [vmem:[%s8 + $0x20] sm:$0xff]
        %v1737 = vld [vmem:[%s8 + $0x28] sm:$0xff]
        %v1738 = vld [vmem:[%s8 + $0x30] sm:$0xff]
        %v1739 = vld [vmem:[%s8 + $0x38] sm:$0xff]
        %v1740 = vld [vmem:[%s8 + $0x40] sm:$0xff]
        %v1741 = vld [vmem:[%s8 + $0x48] sm:$0xff]
        %v1742 = vld [vmem:[%s8 + $0x50] sm:$0xff]
        %v1743 = vld [vmem:[%s8 + $0x58] sm:$0xff]
        %v1744 = vld [vmem:[%s8 + $0x60] sm:$0xff]
        %v1745 = vld [vmem:[%s8 + $0x68] sm:$0xff]
        %v1746 = vld [vmem:[%s8 + $0x70] sm:$0xff]
        %v1747 = vld [vmem:[%s8 + $0x78] sm:$0xff]
        %v1748 = vld [vmem:[%s9] sm:$0x3]
        %v1750 = vlaneseq
        %v1751 = vshrl.u32 %v1750, 7
        %v1752 = vsub.s32 0, %v1751
        %v1753 = vrot.slane %v1748, %v1752
        %v1754 = vlaneseq
        %v1755 = vshrl.u32 %v1754, 7
        %v1756 = vsub.s32 1, %v1755
        %v1757 = vrot.slane %v1748, %v1756
        %v1776 = vunpack.c.l.b16 %v1732
        %v1777 = vunpack.c.h.b16 %v1732
        %v1778 = vunpack.c.l.b16 %v1733
        %v1779 = vunpack.c.h.b16 %v1733
        %v1780 = vunpack.c.l.b16 %v1734
        %v1781 = vunpack.c.h.b16 %v1734
        %v1782 = vunpack.c.l.b16 %v1735
        %v1783 = vunpack.c.h.b16 %v1735
        %v1784 = vunpack.c.l.b16 %v1736
        %v1785 = vunpack.c.h.b16 %v1736
        %v1786 = vunpack.c.l.b16 %v1737
        %v1787 = vunpack.c.h.b16 %v1737
        %v1788 = vunpack.c.l.b16 %v1738
        %v1789 = vunpack.c.h.b16 %v1738
        %v1790 = vunpack.c.l.b16 %v1739
        %v1791 = vunpack.c.h.b16 %v1739
        %v1792 = vunpack.c.l.b16 %v1740
        %v1793 = vunpack.c.h.b16 %v1740
        %v1794 = vunpack.c.l.b16 %v1741
        %v1795 = vunpack.c.h.b16 %v1741
        %v1796 = vunpack.c.l.b16 %v1742
        %v1797 = vunpack.c.h.b16 %v1742
        %v1798 = vunpack.c.l.b16 %v1743
        %v1799 = vunpack.c.h.b16 %v1743
        %v1800 = vunpack.c.l.b16 %v1744
        %v1801 = vunpack.c.h.b16 %v1744
        %v1802 = vunpack.c.l.b16 %v1745
        %v1803 = vunpack.c.h.b16 %v1745
        %v1804 = vunpack.c.l.b16 %v1746
        %v1805 = vunpack.c.h.b16 %v1746
        %v1806 = vunpack.c.l.b16 %v1747
        %v1807 = vunpack.c.h.b16 %v1747
        %v1808 = vpack.c.b16 %v1778, %v1776
        %v1809 = vpack.c.b16 %v1779, %v1777
        %v1810 = vpack.c.b16 %v1782, %v1780
        %v1811 = vpack.c.b16 %v1783, %v1781
        %v1812 = vpack.c.b16 %v1786, %v1784
        %v1813 = vpack.c.b16 %v1787, %v1785
        %v1814 = vpack.c.b16 %v1790, %v1788
        %v1815 = vpack.c.b16 %v1791, %v1789
        %v1816 = vpack.c.b16 %v1794, %v1792
        %v1817 = vpack.c.b16 %v1795, %v1793
        %v1818 = vpack.c.b16 %v1798, %v1796
        %v1819 = vpack.c.b16 %v1799, %v1797
        %v1820 = vpack.c.b16 %v1802, %v1800
        %v1821 = vpack.c.b16 %v1803, %v1801
        %v1822 = vpack.c.b16 %v1806, %v1804
        %v1823 = vpack.c.b16 %v1807, %v1805
        %1840 = vmatprep.subr.bf16.mxu0 %v1809
        %1841 = vmatpush1.bf16.msra.mxu0 %v1808
        %1842 = vmatprep.subr.bf16.mxu0 %v1811
        %1843 = vmatpush1.bf16.msra.mxu0 %v1810
        %1844 = vmatprep.subr.bf16.mxu0 %v1813
        %1845 = vmatpush1.bf16.msra.mxu0 %v1812
        %1846 = vmatprep.subr.bf16.mxu0 %v1815
        %1847 = vmatpush1.bf16.msra.mxu0 %v1814
        %1848 = vmatprep.subr.bf16.mxu0 %v1817
        %1849 = vmatpush1.bf16.msra.mxu0 %v1816
        %1850 = vmatprep.subr.bf16.mxu0 %v1819
        %1851 = vmatpush1.bf16.msra.mxu0 %v1818
        %1852 = vmatprep.subr.bf16.mxu0 %v1821
        %1853 = vmatpush1.bf16.msra.mxu0 %v1820
        %1854 = vmatprep.subr.bf16.mxu0 %v1823
        %1855 = vmatpush1.bf16.msra.mxu0 %v1822
        %1856 = vmatprep.subr.bf16.mxu0 0
        %1857 = vmatpush1.bf16.msra.mxu0 0
        %1858 = vmatprep.subr.bf16.mxu0 0
        %1859 = vmatpush1.bf16.msra.mxu0 0
        %1860 = vmatprep.subr.bf16.mxu0 0
        %1861 = vmatpush1.bf16.msra.mxu0 0
        %1862 = vmatprep.subr.bf16.mxu0 0
        %1863 = vmatpush1.bf16.msra.mxu0 0
        %1864 = vmatprep.subr.bf16.mxu0 0
        %1865 = vmatpush1.bf16.msra.mxu0 0
        %1866 = vmatprep.subr.bf16.mxu0 0
        %1867 = vmatpush1.bf16.msra.mxu0 0
        %1868 = vmatprep.subr.bf16.mxu0 0
        %1869 = vmatpush1.bf16.msra.mxu0 0
        %1870 = vmatprep.subr.bf16.mxu0 0
        %1871 = vmatpush1.bf16.msra.mxu0 0
        %1872 = vmatprep.mubr.bf16.mxu0 0
        %1873 = vmatmul.mubr.bf16.gmra.mrb[0].mxu0 %v1716
        %v1874 = vpop.f32.mrb[0].mxu0
        %v1875 = vadd.f32 %v1753, %v1874
        %v1876 = vpop.f32.mrb[0].mxu0
        %v1877 = vadd.f32 %v1757, %v1876
        %v1878 = vpop.f32.mrb[0].mxu0
        %v1879 = vadd.f32 %v1753, %v1878
        %v1880 = vpop.f32.mrb[0].mxu0
        %v1881 = vadd.f32 %v1757, %v1880
        %1882 = vmatprep.mubr.bf16.mxu0 0
        %1883 = vmatmul.mubr.bf16.gmra.mrb[0].mxu0 %v1717
        %v1884 = vpop.f32.mrb[0].mxu0
        %v1885 = vadd.f32 %v1753, %v1884
        %v1886 = vpop.f32.mrb[0].mxu0
        %v1887 = vadd.f32 %v1757, %v1886
        %v1888 = vpop.f32.mrb[0].mxu0
        %v1889 = vadd.f32 %v1753, %v1888
        %v1890 = vpop.f32.mrb[0].mxu0
        %v1891 = vadd.f32 %v1757, %v1890
        %1892 = vmatprep.mubr.bf16.mxu0 0
        %1893 = vmatmul.mubr.bf16.gmra.mrb[0].mxu0 %v1718
        %v1894 = vpop.f32.mrb[0].mxu0
        %v1895 = vadd.f32 %v1753, %v1894
        %v1896 = vpop.f32.mrb[0].mxu0
        %v1897 = vadd.f32 %v1757, %v1896
        %v1898 = vpop.f32.mrb[0].mxu0
        %v1899 = vadd.f32 %v1753, %v1898
        %v1900 = vpop.f32.mrb[0].mxu0
        %v1901 = vadd.f32 %v1757, %v1900
        %1902 = vmatprep.mubr.bf16.mxu0 0
        %1903 = vmatmul.mubr.bf16.gmra.mrb[0].mxu0 %v1719
        %v1904 = vpop.f32.mrb[0].mxu0
        %v1905 = vadd.f32 %v1753, %v1904
        %v1906 = vpop.f32.mrb[0].mxu0
        %v1907 = vadd.f32 %v1757, %v1906
        %v1908 = vpop.f32.mrb[0].mxu0
        %v1909 = vadd.f32 %v1753, %v1908
        %v1910 = vpop.f32.mrb[0].mxu0
        %v1911 = vadd.f32 %v1757, %v1910
        %1912 = vmatprep.mubr.bf16.mxu0 0
        %1913 = vmatmul.mubr.bf16.gmra.mrb[0].mxu0 %v1720
        %v1914 = vpop.f32.mrb[0].mxu0
        %v1915 = vadd.f32 %v1753, %v1914
        %v1916 = vpop.f32.mrb[0].mxu0
        %v1917 = vadd.f32 %v1757, %v1916
        %v1918 = vpop.f32.mrb[0].mxu0
        %v1919 = vadd.f32 %v1753, %v1918
        %v1920 = vpop.f32.mrb[0].mxu0
        %v1921 = vadd.f32 %v1757, %v1920
        %1922 = vmatprep.mubr.bf16.mxu0 0
        %1923 = vmatmul.mubr.bf16.gmra.mrb[0].mxu0 %v1721
        %v1924 = vpop.f32.mrb[0].mxu0
        %v1925 = vadd.f32 %v1753, %v1924
        %v1926 = vpop.f32.mrb[0].mxu0
        %v1927 = vadd.f32 %v1757, %v1926
        %v1928 = vpop.f32.mrb[0].mxu0
        %v1929 = vadd.f32 %v1753, %v1928
        %v1930 = vpop.f32.mrb[0].mxu0
        %v1931 = vadd.f32 %v1757, %v1930
        %1932 = vmatprep.mubr.bf16.mxu0 0
        %1933 = vmatmul.mubr.bf16.gmra.mrb[0].mxu0 %v1722
        %v1934 = vpop.f32.mrb[0].mxu0
        %v1935 = vadd.f32 %v1753, %v1934
        %v1936 = vpop.f32.mrb[0].mxu0
        %v1937 = vadd.f32 %v1757, %v1936
        %v1938 = vpop.f32.mrb[0].mxu0
        %v1939 = vadd.f32 %v1753, %v1938
        %v1940 = vpop.f32.mrb[0].mxu0
        %v1941 = vadd.f32 %v1757, %v1940
        %1942 = vmatprep.mubr.bf16.mxu0 0
        %1943 = vmatmul.mubr.bf16.gmra.mrb[0].mxu0 %v1723
        %v1944 = vpop.f32.mrb[0].mxu0
        %v1945 = vadd.f32 %v1753, %v1944
        %v1946 = vpop.f32.mrb[0].mxu0
        %v1947 = vadd.f32 %v1757, %v1946
        %v1948 = vpop.f32.mrb[0].mxu0
        %v1949 = vadd.f32 %v1753, %v1948
        %v1950 = vpop.f32.mrb[0].mxu0
        %v1951 = vadd.f32 %v1757, %v1950
        %1952 = vmatprep.mubr.bf16.mxu0 0
        %1953 = vmatmul.mubr.bf16.gmra.mrb[0].mxu0 %v1724
        %v1954 = vpop.f32.mrb[0].mxu0
        %v1955 = vadd.f32 %v1753, %v1954
        %v1956 = vpop.f32.mrb[0].mxu0
        %v1957 = vadd.f32 %v1757, %v1956
        %v1958 = vpop.f32.mrb[0].mxu0
        %v1959 = vadd.f32 %v1753, %v1958
        %v1960 = vpop.f32.mrb[0].mxu0
        %v1961 = vadd.f32 %v1757, %v1960
        %1962 = vmatprep.mubr.bf16.mxu0 0
        %1963 = vmatmul.mubr.bf16.gmra.mrb[0].mxu0 %v1725
        %v1964 = vpop.f32.mrb[0].mxu0
        %v1965 = vadd.f32 %v1753, %v1964
        %v1966 = vpop.f32.mrb[0].mxu0
        %v1967 = vadd.f32 %v1757, %v1966
        %v1968 = vpop.f32.mrb[0].mxu0
        %v1969 = vadd.f32 %v1753, %v1968
        %v1970 = vpop.f32.mrb[0].mxu0
        %v1971 = vadd.f32 %v1757, %v1970
        %1972 = vmatprep.mubr.bf16.mxu0 0
        %1973 = vmatmul.mubr.bf16.gmra.mrb[0].mxu0 %v1726
        %v1974 = vpop.f32.mrb[0].mxu0
        %v1975 = vadd.f32 %v1753, %v1974
        %v1976 = vpop.f32.mrb[0].mxu0
        %v1977 = vadd.f32 %v1757, %v1976
        %v1978 = vpop.f32.mrb[0].mxu0
        %v1979 = vadd.f32 %v1753, %v1978
        %v1980 = vpop.f32.mrb[0].mxu0
        %v1981 = vadd.f32 %v1757, %v1980
        %1982 = vmatprep.mubr.bf16.mxu0 0
        %1983 = vmatmul.mubr.bf16.gmra.mrb[0].mxu0 %v1727
        %v1984 = vpop.f32.mrb[0].mxu0
        %v1985 = vadd.f32 %v1753, %v1984
        %v1986 = vpop.f32.mrb[0].mxu0
        %v1987 = vadd.f32 %v1757, %v1986
        %v1988 = vpop.f32.mrb[0].mxu0
        %v1989 = vadd.f32 %v1753, %v1988
        %v1990 = vpop.f32.mrb[0].mxu0
        %v1991 = vadd.f32 %v1757, %v1990
        %1992 = vmatprep.mubr.bf16.mxu0 0
        %1993 = vmatmul.mubr.bf16.gmra.mrb[0].mxu0 %v1728
        %v1994 = vpop.f32.mrb[0].mxu0
        %v1995 = vadd.f32 %v1753, %v1994
        %v1996 = vpop.f32.mrb[0].mxu0
        %v1997 = vadd.f32 %v1757, %v1996
        %v1998 = vpop.f32.mrb[0].mxu0
        %v1999 = vadd.f32 %v1753, %v1998
        %v2000 = vpop.f32.mrb[0].mxu0
        %v2001 = vadd.f32 %v1757, %v2000
        %2002 = vmatprep.mubr.bf16.mxu0 0
        %2003 = vmatmul.mubr.bf16.gmra.mrb[0].mxu0 %v1729
        %v2004 = vpop.f32.mrb[0].mxu0
        %v2005 = vadd.f32 %v1753, %v2004
        %v2006 = vpop.f32.mrb[0].mxu0
        %v2007 = vadd.f32 %v1757, %v2006
        %v2008 = vpop.f32.mrb[0].mxu0
        %v2009 = vadd.f32 %v1753, %v2008
        %v2010 = vpop.f32.mrb[0].mxu0
        %v2011 = vadd.f32 %v1757, %v2010
        %2012 = vmatprep.mubr.bf16.mxu0 0
        %2013 = vmatmul.mubr.bf16.gmra.mrb[0].mxu0 %v1730
        %v2014 = vpop.f32.mrb[0].mxu0
        %v2015 = vadd.f32 %v1753, %v2014
        %v2016 = vpop.f32.mrb[0].mxu0
        %v2017 = vadd.f32 %v1757, %v2016
        %v2018 = vpop.f32.mrb[0].mxu0
        %v2019 = vadd.f32 %v1753, %v2018
        %v2020 = vpop.f32.mrb[0].mxu0
        %v2021 = vadd.f32 %v1757, %v2020
        %2022 = vmatprep.mubr.bf16.mxu0 0
        %2023 = vmatmul.mubr.bf16.gmra.mrb[0].mxu0 %v1731
        %v2024 = vpop.f32.mrb[0].mxu0
        %v2025 = vadd.f32 %v1753, %v2024
        %v2026 = vpop.f32.mrb[0].mxu0
        %v2027 = vadd.f32 %v1757, %v2026
        %v2028 = vpop.f32.mrb[0].mxu0
        %v2029 = vadd.f32 %v1753, %v2028
        %v2030 = vpop.f32.mrb[0].mxu0
        %v2031 = vadd.f32 %v1757, %v2030
        %2032 = vdwg.mxu0
        %v2033 = vxor.u32 %v1875, 2147483648
        %v2034 = vxor.u32 %v1877, 2147483648
        %v2035 = vxor.u32 %v1879, 2147483648
        %v2036 = vxor.u32 %v1881, 2147483648
        %v2037 = vxor.u32 %v1885, 2147483648
        %v2038 = vxor.u32 %v1887, 2147483648
        %v2039 = vxor.u32 %v1889, 2147483648
        %v2040 = vxor.u32 %v1891, 2147483648
        %v2041 = vxor.u32 %v1895, 2147483648
        %v2042 = vxor.u32 %v1897, 2147483648
        %v2043 = vxor.u32 %v1899, 2147483648
        %v2044 = vxor.u32 %v1901, 2147483648
        %v2045 = vxor.u32 %v1905, 2147483648
        %v2046 = vxor.u32 %v1907, 2147483648
        %v2047 = vxor.u32 %v1909, 2147483648
        %v2048 = vxor.u32 %v1911, 2147483648
        %v2049 = vxor.u32 %v1915, 2147483648
        %v2050 = vxor.u32 %v1917, 2147483648
        %v2051 = vxor.u32 %v1919, 2147483648
        %v2052 = vxor.u32 %v1921, 2147483648
        %v2053 = vxor.u32 %v1925, 2147483648
        %v2054 = vxor.u32 %v1927, 2147483648
        %v2055 = vxor.u32 %v1929, 2147483648
        %v2056 = vxor.u32 %v1931, 2147483648
        %v2057 = vxor.u32 %v1935, 2147483648
        %v2058 = vxor.u32 %v1937, 2147483648
        %v2059 = vxor.u32 %v1939, 2147483648
        %v2060 = vxor.u32 %v1941, 2147483648
        %v2061 = vxor.u32 %v1945, 2147483648
        %v2062 = vxor.u32 %v1947, 2147483648
        %v2063 = vxor.u32 %v1949, 2147483648
        %v2064 = vxor.u32 %v1951, 2147483648
        %v2065 = vxor.u32 %v1955, 2147483648
        %v2066 = vxor.u32 %v1957, 2147483648
        %v2067 = vxor.u32 %v1959, 2147483648
        %v2068 = vxor.u32 %v1961, 2147483648
        %v2069 = vxor.u32 %v1965, 2147483648
        %v2070 = vxor.u32 %v1967, 2147483648
        %v2071 = vxor.u32 %v1969, 2147483648
        %v2072 = vxor.u32 %v1971, 2147483648
        %v2073 = vxor.u32 %v1975, 2147483648
        %v2074 = vxor.u32 %v1977, 2147483648
        %v2075 = vxor.u32 %v1979, 2147483648
        %v2076 = vxor.u32 %v1981, 2147483648
        %v2077 = vxor.u32 %v1985, 2147483648
        %v2078 = vxor.u32 %v1987, 2147483648
        %v2079 = vxor.u32 %v1989, 2147483648
        %v2080 = vxor.u32 %v1991, 2147483648
        %v2081 = vxor.u32 %v1995, 2147483648
        %v2082 = vxor.u32 %v1997, 2147483648
        %v2083 = vxor.u32 %v1999, 2147483648
        %v2084 = vxor.u32 %v2001, 2147483648
        %v2085 = vxor.u32 %v2005, 2147483648
        %v2086 = vxor.u32 %v2007, 2147483648
        %v2087 = vxor.u32 %v2009, 2147483648
        %v2088 = vxor.u32 %v2011, 2147483648
        %v2089 = vxor.u32 %v2015, 2147483648
        %v2090 = vxor.u32 %v2017, 2147483648
        %v2091 = vxor.u32 %v2019, 2147483648
        %v2092 = vxor.u32 %v2021, 2147483648
        %v2093 = vxor.u32 %v2025, 2147483648
        %v2094 = vxor.u32 %v2027, 2147483648
        %v2095 = vxor.u32 %v2029, 2147483648
        %v2096 = vxor.u32 %v2031, 2147483648
        %v2097 = vmul.f32 %v2033, 1.442695
        %v2098 = vpow.pop %v2097
        %v2099 = vmul.f32 %v2034, 1.442695
        %v2100 = vpow.pop %v2099
        %v2101 = vmul.f32 %v2035, 1.442695
        %v2102 = vpow.pop %v2101
        %v2103 = vmul.f32 %v2036, 1.442695
        %v2104 = vpow.pop %v2103
        %v2105 = vmul.f32 %v2037, 1.442695
        %v2106 = vpow.pop %v2105
        %v2107 = vmul.f32 %v2038, 1.442695
        %v2108 = vpow.pop %v2107
        %v2109 = vmul.f32 %v2039, 1.442695
        %v2110 = vpow.pop %v2109
        %v2111 = vmul.f32 %v2040, 1.442695
        %v2112 = vpow.pop %v2111
        %v2113 = vmul.f32 %v2041, 1.442695
        %v2114 = vpow.pop %v2113
        %v2115 = vmul.f32 %v2042, 1.442695
        %v2116 = vpow.pop %v2115
        %v2117 = vmul.f32 %v2043, 1.442695
        %v2118 = vpow.pop %v2117
        %v2119 = vmul.f32 %v2044, 1.442695
        %v2120 = vpow.pop %v2119
        %v2121 = vmul.f32 %v2045, 1.442695
        %v2122 = vpow.pop %v2121
        %v2123 = vmul.f32 %v2046, 1.442695
        %v2124 = vpow.pop %v2123
        %v2125 = vmul.f32 %v2047, 1.442695
        %v2126 = vpow.pop %v2125
        %v2127 = vmul.f32 %v2048, 1.442695
        %v2128 = vpow.pop %v2127
        %v2129 = vmul.f32 %v2049, 1.442695
        %v2130 = vpow.pop %v2129
        %v2131 = vmul.f32 %v2050, 1.442695
        %v2132 = vpow.pop %v2131
        %v2133 = vmul.f32 %v2051, 1.442695
        %v2134 = vpow.pop %v2133
        %v2135 = vmul.f32 %v2052, 1.442695
        %v2136 = vpow.pop %v2135
        %v2137 = vmul.f32 %v2053, 1.442695
        %v2138 = vpow.pop %v2137
        %v2139 = vmul.f32 %v2054, 1.442695
        %v2140 = vpow.pop %v2139
        %v2141 = vmul.f32 %v2055, 1.442695
        %v2142 = vpow.pop %v2141
        %v2143 = vmul.f32 %v2056, 1.442695
        %v2144 = vpow.pop %v2143
        %v2145 = vmul.f32 %v2057, 1.442695
        %v2146 = vpow.pop %v2145
        %v2147 = vmul.f32 %v2058, 1.442695
        %v2148 = vpow.pop %v2147
        %v2149 = vmul.f32 %v2059, 1.442695
        %v2150 = vpow.pop %v2149
        %v2151 = vmul.f32 %v2060, 1.442695
        %v2152 = vpow.pop %v2151
        %v2153 = vmul.f32 %v2061, 1.442695
        %v2154 = vpow.pop %v2153
        %v2155 = vmul.f32 %v2062, 1.442695
        %v2156 = vpow.pop %v2155
        %v2157 = vmul.f32 %v2063, 1.442695
        %v2158 = vpow.pop %v2157
        %v2159 = vmul.f32 %v2064, 1.442695
        %v2160 = vpow.pop %v2159
        %v2161 = vmul.f32 %v2065, 1.442695
        %v2162 = vpow.pop %v2161
        %v2163 = vmul.f32 %v2066, 1.442695
        %v2164 = vpow.pop %v2163
        %v2165 = vmul.f32 %v2067, 1.442695
        %v2166 = vpow.pop %v2165
        %v2167 = vmul.f32 %v2068, 1.442695
        %v2168 = vpow.pop %v2167
        %v2169 = vmul.f32 %v2069, 1.442695
        %v2170 = vpow.pop %v2169
        %v2171 = vmul.f32 %v2070, 1.442695
        %v2172 = vpow.pop %v2171
        %v2173 = vmul.f32 %v2071, 1.442695
        %v2174 = vpow.pop %v2173
        %v2175 = vmul.f32 %v2072, 1.442695
        %v2176 = vpow.pop %v2175
        %v2177 = vmul.f32 %v2073, 1.442695
        %v2178 = vpow.pop %v2177
        %v2179 = vmul.f32 %v2074, 1.442695
        %v2180 = vpow.pop %v2179
        %v2181 = vmul.f32 %v2075, 1.442695
        %v2182 = vpow.pop %v2181
        %v2183 = vmul.f32 %v2076, 1.442695
        %v2184 = vpow.pop %v2183
        %v2185 = vmul.f32 %v2077, 1.442695
        %v2186 = vpow.pop %v2185
        %v2187 = vmul.f32 %v2078, 1.442695
        %v2188 = vpow.pop %v2187
        %v2189 = vmul.f32 %v2079, 1.442695
        %v2190 = vpow.pop %v2189
        %v2191 = vmul.f32 %v2080, 1.442695
        %v2192 = vpow.pop %v2191
        %v2193 = vmul.f32 %v2081, 1.442695
        %v2194 = vpow.pop %v2193
        %v2195 = vmul.f32 %v2082, 1.442695
        %v2196 = vpow.pop %v2195
        %v2197 = vmul.f32 %v2083, 1.442695
        %v2198 = vpow.pop %v2197
        %v2199 = vmul.f32 %v2084, 1.442695
        %v2200 = vpow.pop %v2199
        %v2201 = vmul.f32 %v2085, 1.442695
        %v2202 = vpow.pop %v2201
        %v2203 = vmul.f32 %v2086, 1.442695
        %v2204 = vpow.pop %v2203
        %v2205 = vmul.f32 %v2087, 1.442695
        %v2206 = vpow.pop %v2205
        %v2207 = vmul.f32 %v2088, 1.442695
        %v2208 = vpow.pop %v2207
        %v2209 = vmul.f32 %v2089, 1.442695
        %v2210 = vpow.pop %v2209
        %v2211 = vmul.f32 %v2090, 1.442695
        %v2212 = vpow.pop %v2211
        %v2213 = vmul.f32 %v2091, 1.442695
        %v2214 = vpow.pop %v2213
        %v2215 = vmul.f32 %v2092, 1.442695
        %v2216 = vpow.pop %v2215
        %v2217 = vmul.f32 %v2093, 1.442695
        %v2218 = vpow.pop %v2217
        %v2219 = vmul.f32 %v2094, 1.442695
        %v2220 = vpow.pop %v2219
        %v2221 = vmul.f32 %v2095, 1.442695
        %v2222 = vpow.pop %v2221
        %v2223 = vmul.f32 %v2096, 1.442695
        %v2224 = vpow.pop %v2223
        %v2225 = vadd.f32 %v2098, 1.0
        %v2226 = vadd.f32 %v2100, 1.0
        %v2227 = vadd.f32 %v2102, 1.0
        %v2228 = vadd.f32 %v2104, 1.0
        %v2229 = vadd.f32 %v2106, 1.0
        %v2230 = vadd.f32 %v2108, 1.0
        %v2231 = vadd.f32 %v2110, 1.0
        %v2232 = vadd.f32 %v2112, 1.0
        %v2233 = vadd.f32 %v2114, 1.0
        %v2234 = vadd.f32 %v2116, 1.0
        %v2235 = vadd.f32 %v2118, 1.0
        %v2236 = vadd.f32 %v2120, 1.0
        %v2237 = vadd.f32 %v2122, 1.0
        %v2238 = vadd.f32 %v2124, 1.0
        %v2239 = vadd.f32 %v2126, 1.0
        %v2240 = vadd.f32 %v2128, 1.0
        %v2241 = vadd.f32 %v2130, 1.0
        %v2242 = vadd.f32 %v2132, 1.0
        %v2243 = vadd.f32 %v2134, 1.0
        %v2244 = vadd.f32 %v2136, 1.0
        %v2245 = vadd.f32 %v2138, 1.0
        %v2246 = vadd.f32 %v2140, 1.0
        %v2247 = vadd.f32 %v2142, 1.0
        %v2248 = vadd.f32 %v2144, 1.0
        %v2249 = vadd.f32 %v2146, 1.0
        %v2250 = vadd.f32 %v2148, 1.0
        %v2251 = vadd.f32 %v2150, 1.0
        %v2252 = vadd.f32 %v2152, 1.0
        %v2253 = vadd.f32 %v2154, 1.0
        %v2254 = vadd.f32 %v2156, 1.0
        %v2255 = vadd.f32 %v2158, 1.0
        %v2256 = vadd.f32 %v2160, 1.0
        %v2257 = vadd.f32 %v2162, 1.0
        %v2258 = vadd.f32 %v2164, 1.0
        %v2259 = vadd.f32 %v2166, 1.0
        %v2260 = vadd.f32 %v2168, 1.0
        %v2261 = vadd.f32 %v2170, 1.0
        %v2262 = vadd.f32 %v2172, 1.0
        %v2263 = vadd.f32 %v2174, 1.0
        %v2264 = vadd.f32 %v2176, 1.0
        %v2265 = vadd.f32 %v2178, 1.0
        %v2266 = vadd.f32 %v2180, 1.0
        %v2267 = vadd.f32 %v2182, 1.0
        %v2268 = vadd.f32 %v2184, 1.0
        %v2269 = vadd.f32 %v2186, 1.0
        %v2270 = vadd.f32 %v2188, 1.0
        %v2271 = vadd.f32 %v2190, 1.0
        %v2272 = vadd.f32 %v2192, 1.0
        %v2273 = vadd.f32 %v2194, 1.0
        %v2274 = vadd.f32 %v2196, 1.0
        %v2275 = vadd.f32 %v2198, 1.0
        %v2276 = vadd.f32 %v2200, 1.0
        %v2277 = vadd.f32 %v2202, 1.0
        %v2278 = vadd.f32 %v2204, 1.0
        %v2279 = vadd.f32 %v2206, 1.0
        %v2280 = vadd.f32 %v2208, 1.0
        %v2281 = vadd.f32 %v2210, 1.0
        %v2282 = vadd.f32 %v2212, 1.0
        %v2283 = vadd.f32 %v2214, 1.0
        %v2284 = vadd.f32 %v2216, 1.0
        %v2285 = vadd.f32 %v2218, 1.0
        %v2286 = vadd.f32 %v2220, 1.0
        %v2287 = vadd.f32 %v2222, 1.0
        %v2288 = vadd.f32 %v2224, 1.0
        %v2289 = vrcp.pop %v2225
        %v2290 = vmul.f32 1.0, %v2289
        %v2291 = vrcp.pop %v2226
        %v2292 = vmul.f32 1.0, %v2291
        %v2293 = vrcp.pop %v2227
        %v2294 = vmul.f32 1.0, %v2293
        %v2295 = vrcp.pop %v2228
        %v2296 = vmul.f32 1.0, %v2295
        %v2297 = vrcp.pop %v2229
        %v2298 = vmul.f32 1.0, %v2297
        %v2299 = vrcp.pop %v2230
        %v2300 = vmul.f32 1.0, %v2299
        %v2301 = vrcp.pop %v2231
        %v2302 = vmul.f32 1.0, %v2301
        %v2303 = vrcp.pop %v2232
        %v2304 = vmul.f32 1.0, %v2303
        %v2305 = vrcp.pop %v2233
        %v2306 = vmul.f32 1.0, %v2305
        %v2307 = vrcp.pop %v2234
        %v2308 = vmul.f32 1.0, %v2307
        %v2309 = vrcp.pop %v2235
        %v2310 = vmul.f32 1.0, %v2309
        %v2311 = vrcp.pop %v2236
        %v2312 = vmul.f32 1.0, %v2311
        %v2313 = vrcp.pop %v2237
        %v2314 = vmul.f32 1.0, %v2313
        %v2315 = vrcp.pop %v2238
        %v2316 = vmul.f32 1.0, %v2315
        %v2317 = vrcp.pop %v2239
        %v2318 = vmul.f32 1.0, %v2317
        %v2319 = vrcp.pop %v2240
        %v2320 = vmul.f32 1.0, %v2319
        %v2321 = vrcp.pop %v2241
        %v2322 = vmul.f32 1.0, %v2321
        %v2323 = vrcp.pop %v2242
        %v2324 = vmul.f32 1.0, %v2323
        %v2325 = vrcp.pop %v2243
        %v2326 = vmul.f32 1.0, %v2325
        %v2327 = vrcp.pop %v2244
        %v2328 = vmul.f32 1.0, %v2327
        %v2329 = vrcp.pop %v2245
        %v2330 = vmul.f32 1.0, %v2329
        %v2331 = vrcp.pop %v2246
        %v2332 = vmul.f32 1.0, %v2331
        %v2333 = vrcp.pop %v2247
        %v2334 = vmul.f32 1.0, %v2333
        %v2335 = vrcp.pop %v2248
        %v2336 = vmul.f32 1.0, %v2335
        %v2337 = vrcp.pop %v2249
        %v2338 = vmul.f32 1.0, %v2337
        %v2339 = vrcp.pop %v2250
        %v2340 = vmul.f32 1.0, %v2339
        %v2341 = vrcp.pop %v2251
        %v2342 = vmul.f32 1.0, %v2341
        %v2343 = vrcp.pop %v2252
        %v2344 = vmul.f32 1.0, %v2343
        %v2345 = vrcp.pop %v2253
        %v2346 = vmul.f32 1.0, %v2345
        %v2347 = vrcp.pop %v2254
        %v2348 = vmul.f32 1.0, %v2347
        %v2349 = vrcp.pop %v2255
        %v2350 = vmul.f32 1.0, %v2349
        %v2351 = vrcp.pop %v2256
        %v2352 = vmul.f32 1.0, %v2351
        %v2353 = vrcp.pop %v2257
        %v2354 = vmul.f32 1.0, %v2353
        %v2355 = vrcp.pop %v2258
        %v2356 = vmul.f32 1.0, %v2355
        %v2357 = vrcp.pop %v2259
        %v2358 = vmul.f32 1.0, %v2357
        %v2359 = vrcp.pop %v2260
        %v2360 = vmul.f32 1.0, %v2359
        %v2361 = vrcp.pop %v2261
        %v2362 = vmul.f32 1.0, %v2361
        %v2363 = vrcp.pop %v2262
        %v2364 = vmul.f32 1.0, %v2363
        %v2365 = vrcp.pop %v2263
        %v2366 = vmul.f32 1.0, %v2365
        %v2367 = vrcp.pop %v2264
        %v2368 = vmul.f32 1.0, %v2367
        %v2369 = vrcp.pop %v2265
        %v2370 = vmul.f32 1.0, %v2369
        %v2371 = vrcp.pop %v2266
        %v2372 = vmul.f32 1.0, %v2371
        %v2373 = vrcp.pop %v2267
        %v2374 = vmul.f32 1.0, %v2373
        %v2375 = vrcp.pop %v2268
        %v2376 = vmul.f32 1.0, %v2375
        %v2377 = vrcp.pop %v2269
        %v2378 = vmul.f32 1.0, %v2377
        %v2379 = vrcp.pop %v2270
        %v2380 = vmul.f32 1.0, %v2379
        %v2381 = vrcp.pop %v2271
        %v2382 = vmul.f32 1.0, %v2381
        %v2383 = vrcp.pop %v2272
        %v2384 = vmul.f32 1.0, %v2383
        %v2385 = vrcp.pop %v2273
        %v2386 = vmul.f32 1.0, %v2385
        %v2387 = vrcp.pop %v2274
        %v2388 = vmul.f32 1.0, %v2387
        %v2389 = vrcp.pop %v2275
        %v2390 = vmul.f32 1.0, %v2389
        %v2391 = vrcp.pop %v2276
        %v2392 = vmul.f32 1.0, %v2391
        %v2393 = vrcp.pop %v2277
        %v2394 = vmul.f32 1.0, %v2393
        %v2395 = vrcp.pop %v2278
        %v2396 = vmul.f32 1.0, %v2395
        %v2397 = vrcp.pop %v2279
        %v2398 = vmul.f32 1.0, %v2397
        %v2399 = vrcp.pop %v2280
        %v2400 = vmul.f32 1.0, %v2399
        %v2401 = vrcp.pop %v2281
        %v2402 = vmul.f32 1.0, %v2401
        %v2403 = vrcp.pop %v2282
        %v2404 = vmul.f32 1.0, %v2403
        %v2405 = vrcp.pop %v2283
        %v2406 = vmul.f32 1.0, %v2405
        %v2407 = vrcp.pop %v2284
        %v2408 = vmul.f32 1.0, %v2407
        %v2409 = vrcp.pop %v2285
        %v2410 = vmul.f32 1.0, %v2409
        %v2411 = vrcp.pop %v2286
        %v2412 = vmul.f32 1.0, %v2411
        %v2413 = vrcp.pop %v2287
        %v2414 = vmul.f32 1.0, %v2413
        %v2415 = vrcp.pop %v2288
        %v2416 = vmul.f32 1.0, %v2415
        %2417 = vst [vmem:[%s425] sm:$0xff] %v2290
        %2418 = vst [vmem:[%s425 + $0x8] sm:$0xff] %v2292
        %2419 = vst [vmem:[%s425 + $0x10] sm:$0xff] %v2294
        %2420 = vst [vmem:[%s425 + $0x18] sm:$0xff] %v2296
        %2421 = vst [vmem:[%s425 + $0x20] sm:$0xff] %v2298
        %2422 = vst [vmem:[%s425 + $0x28] sm:$0xff] %v2300
        %2423 = vst [vmem:[%s425 + $0x30] sm:$0xff] %v2302
        %2424 = vst [vmem:[%s425 + $0x38] sm:$0xff] %v2304
        %2425 = vst [vmem:[%s425 + $0x40] sm:$0xff] %v2306
        %2426 = vst [vmem:[%s425 + $0x48] sm:$0xff] %v2308
        %2427 = vst [vmem:[%s425 + $0x50] sm:$0xff] %v2310
        %2428 = vst [vmem:[%s425 + $0x58] sm:$0xff] %v2312
        %2429 = vst [vmem:[%s425 + $0x60] sm:$0xff] %v2314
        %2430 = vst [vmem:[%s425 + $0x68] sm:$0xff] %v2316
        %2431 = vst [vmem:[%s425 + $0x70] sm:$0xff] %v2318
        %2432 = vst [vmem:[%s425 + $0x78] sm:$0xff] %v2320
        %2433 = vst [vmem:[%s425 + $0x80] sm:$0xff] %v2322
        %2434 = vst [vmem:[%s425 + $0x88] sm:$0xff] %v2324
        %2435 = vst [vmem:[%s425 + $0x90] sm:$0xff] %v2326
        %2436 = vst [vmem:[%s425 + $0x98] sm:$0xff] %v2328
        %2437 = vst [vmem:[%s425 + $0xa0] sm:$0xff] %v2330
        %2438 = vst [vmem:[%s425 + $0xa8] sm:$0xff] %v2332
        %2439 = vst [vmem:[%s425 + $0xb0] sm:$0xff] %v2334
        %2440 = vst [vmem:[%s425 + $0xb8] sm:$0xff] %v2336
        %2441 = vst [vmem:[%s425 + $0xc0] sm:$0xff] %v2338
        %2442 = vst [vmem:[%s425 + $0xc8] sm:$0xff] %v2340
        %2443 = vst [vmem:[%s425 + $0xd0] sm:$0xff] %v2342
        %2444 = vst [vmem:[%s425 + $0xd8] sm:$0xff] %v2344
        %2445 = vst [vmem:[%s425 + $0xe0] sm:$0xff] %v2346
        %2446 = vst [vmem:[%s425 + $0xe8] sm:$0xff] %v2348
        %2447 = vst [vmem:[%s425 + $0xf0] sm:$0xff] %v2350
        %2448 = vst [vmem:[%s425 + $0xf8] sm:$0xff] %v2352
        %2449 = vst [vmem:[%s425 + $0x100] sm:$0xff] %v2354
        %2450 = vst [vmem:[%s425 + $0x108] sm:$0xff] %v2356
        %2451 = vst [vmem:[%s425 + $0x110] sm:$0xff] %v2358
        %2452 = vst [vmem:[%s425 + $0x118] sm:$0xff] %v2360
        %2453 = vst [vmem:[%s425 + $0x120] sm:$0xff] %v2362
        %2454 = vst [vmem:[%s425 + $0x128] sm:$0xff] %v2364
        %2455 = vst [vmem:[%s425 + $0x130] sm:$0xff] %v2366
        %2456 = vst [vmem:[%s425 + $0x138] sm:$0xff] %v2368
        %2457 = vst [vmem:[%s425 + $0x140] sm:$0xff] %v2370
        %2458 = vst [vmem:[%s425 + $0x148] sm:$0xff] %v2372
        %2459 = vst [vmem:[%s425 + $0x150] sm:$0xff] %v2374
        %2460 = vst [vmem:[%s425 + $0x158] sm:$0xff] %v2376
        %2461 = vst [vmem:[%s425 + $0x160] sm:$0xff] %v2378
        %2462 = vst [vmem:[%s425 + $0x168] sm:$0xff] %v2380
        %2463 = vst [vmem:[%s425 + $0x170] sm:$0xff] %v2382
        %2464 = vst [vmem:[%s425 + $0x178] sm:$0xff] %v2384
        %2465 = vst [vmem:[%s425 + $0x180] sm:$0xff] %v2386
        %2466 = vst [vmem:[%s425 + $0x188] sm:$0xff] %v2388
        %2467 = vst [vmem:[%s425 + $0x190] sm:$0xff] %v2390
        %2468 = vst [vmem:[%s425 + $0x198] sm:$0xff] %v2392
        %2469 = vst [vmem:[%s425 + $0x1a0] sm:$0xff] %v2394
        %2470 = vst [vmem:[%s425 + $0x1a8] sm:$0xff] %v2396
        %2471 = vst [vmem:[%s425 + $0x1b0] sm:$0xff] %v2398
        %2472 = vst [vmem:[%s425 + $0x1b8] sm:$0xff] %v2400
        %2473 = vst [vmem:[%s425 + $0x1c0] sm:$0xff] %v2402
        %2474 = vst [vmem:[%s425 + $0x1c8] sm:$0xff] %v2404
        %2475 = vst [vmem:[%s425 + $0x1d0] sm:$0xff] %v2406
        %2476 = vst [vmem:[%s425 + $0x1d8] sm:$0xff] %v2408
        %2477 = vst [vmem:[%s425 + $0x1e0] sm:$0xff] %v2410
        %2478 = vst [vmem:[%s425 + $0x1e8] sm:$0xff] %v2412
        %2479 = vst [vmem:[%s425 + $0x1f0] sm:$0xff] %v2414
        %2480 = vst [vmem:[%s425 + $0x1f8] sm:$0xff] %v2416
        %2481 = vst [vmem:[%s432] sm:$0xff] %v1021
        %2482 = vst [vmem:[%s432 + $0x8] sm:$0xff] %v1024
        %2483 = vst [vmem:[%s432 + $0x10] sm:$0xff] %v1029
        %2484 = vst [vmem:[%s432 + $0x18] sm:$0xff] %v1032
        %2485 = vst [vmem:[%s432 + $0x20] sm:$0xff] %v1037
        %2486 = vst [vmem:[%s432 + $0x28] sm:$0xff] %v1040
        %2487 = vst [vmem:[%s432 + $0x30] sm:$0xff] %v1045
        %2488 = vst [vmem:[%s432 + $0x38] sm:$0xff] %v1048
        %2489 = vst [vmem:[%s432 + $0x40] sm:$0xff] %v1053
        %2490 = vst [vmem:[%s432 + $0x48] sm:$0xff] %v1056
        %2491 = vst [vmem:[%s432 + $0x50] sm:$0xff] %v1061
        %2492 = vst [vmem:[%s432 + $0x58] sm:$0xff] %v1064
        %2493 = vst [vmem:[%s432 + $0x60] sm:$0xff] %v1069
        %2494 = vst [vmem:[%s432 + $0x68] sm:$0xff] %v1072
        %2495 = vst [vmem:[%s432 + $0x70] sm:$0xff] %v1077
        %2496 = vst [vmem:[%s432 + $0x78] sm:$0xff] %v1080
        %2497 = vst [vmem:[%s432 + $0x80] sm:$0xff] %v1085
        %2498 = vst [vmem:[%s432 + $0x88] sm:$0xff] %v1088
        %2499 = vst [vmem:[%s432 + $0x90] sm:$0xff] %v1093
        %2500 = vst [vmem:[%s432 + $0x98] sm:$0xff] %v1096
        %2501 = vst [vmem:[%s432 + $0xa0] sm:$0xff] %v1101
        %2502 = vst [vmem:[%s432 + $0xa8] sm:$0xff] %v1104
        %2503 = vst [vmem:[%s432 + $0xb0] sm:$0xff] %v1109
        %2504 = vst [vmem:[%s432 + $0xb8] sm:$0xff] %v1112
        %2505 = vst [vmem:[%s432 + $0xc0] sm:$0xff] %v1117
        %2506 = vst [vmem:[%s432 + $0xc8] sm:$0xff] %v1120
        %2507 = vst [vmem:[%s432 + $0xd0] sm:$0xff] %v1125
        %2508 = vst [vmem:[%s432 + $0xd8] sm:$0xff] %v1128
        %2509 = vst [vmem:[%s432 + $0xe0] sm:$0xff] %v1133
        %2510 = vst [vmem:[%s432 + $0xe8] sm:$0xff] %v1136
        %2511 = vst [vmem:[%s432 + $0xf0] sm:$0xff] %v1141
        %2512 = vst [vmem:[%s432 + $0xf8] sm:$0xff] %v1144
        %s2513 = sand.u32 %s260, 1
        %s2514 = scalar_lea.sflag [#allocation4], %s2513
        %s2515 = sand.u32 %s260, 1
        %s2516 = smul.addr %s2515, 512
        %s2517 = scalar_lea.vmem [#allocation5], %s2516
        %s2518 = sand.u32 %s286, 1
        %s2519 = scalar_lea.sflag [#allocation7], %s2518
        %s2520 = sand.u32 %s286, 1
        %s2521 = smul.addr %s2520, 256
        %s2522 = scalar_lea.vmem [#allocation6], %s2521
        // Predicated region
        $region65: #{tpu_custom_call.1} parent=59 // pred_check
          %p2523 = pneg %p270
        $region66: #{tpu_custom_call.1} parent=59 // pred_check_branch
          %2525 = sbr.rel (%p2523) target = $region68
        $region67: #{tpu_custom_call.1} parent=59 // pred_region
          %s2526 = smul.u32 32, %s32
          %s2528 = ssub.s32 8192, 8192
          %2529 = vsyncadd %s2514, %s2528
          %s2530 = smul.addr %s2526, 2
          %s2531 = smul.addr %s2530, 128
          %s2532 = scalar_lea.hbm %s10, %s2531
          %s2533 = sshll.u32 %s2517, 4
          %s2534 = int_to_ptr.vmem [resolvable:$true] %s2533
          %2539 = dma.vmem_to_hbm [thread:$0]  %s2534, 8192, %s2532, %s2514, 256, 256, 16
        $region68: #{tpu_custom_call.1} parent=59 // pred_fallthru
          _
        // Predicated region
        $region69: #{tpu_custom_call.1} parent=59 // pred_check
          %p2540 = pneg %p296
        $region70: #{tpu_custom_call.1} parent=59 // pred_check_branch
          %2542 = sbr.rel (%p2540) target = $region72
        $region71: #{tpu_custom_call.1} parent=59 // pred_region
          %s2543 = smul.u32 32, %s32
          %s2545 = ssub.s32 4096, 4096
          %2546 = vsyncadd %s2519, %s2545
          %s2547 = smul.addr %s2543, 128
          %s2548 = scalar_lea.hbm %s11, %s2547
          %s2549 = sshll.u32 %s2522, 4
          %s2550 = int_to_ptr.vmem [resolvable:$true] %s2549
          %2555 = dma.vmem_to_hbm [thread:$0]  %s2550, 4096, %s2548, %s2519, 128, 128, 8
        $region72: #{tpu_custom_call.1} parent=59 // pred_fallthru
          _
      $region60: #{tpu_custom_call.1} parent=5 // pred_fallthru
        _
      %p2556 = scmp.le.s32.totalorder 2, %s27
      // Predicated region
      $region73: #{tpu_custom_call.1} parent=5 // pred_check
        %p2557 = pneg %p2556
      $region74: #{tpu_custom_call.1} parent=5 // pred_check_branch
        %2559 = sbr.rel (%p2557) target = $region76
      $region75: #{tpu_custom_call.1} parent=5 // pred_region
        %s2560 = ssub.s32 %s27, 2
        // Predicated region
        $region77: #{tpu_custom_call.1} parent=75 // pred_check
          %p2561 = pneg %p276
        $region78: #{tpu_custom_call.1} parent=75 // pred_check_branch
          %2563 = sbr.rel (%p2561) target = $region80
        $region79: #{tpu_custom_call.1} parent=75 // pred_region
          %s2564 = sand.u32 %s261, 1
          %s2565 = scalar_lea.sflag [#allocation4], %s2564
          %s2566 = sand.u32 %s261, 1
          %s2567 = smul.addr %s2566, 512
          %s2568 = scalar_lea.vmem [#allocation5], %s2567
          %2569 = dma.done %s2565, 8192
        $region80: #{tpu_custom_call.1} parent=75 // pred_fallthru
          _
        // Predicated region
        $region81: #{tpu_custom_call.1} parent=75 // pred_check
          %p2570 = pneg %p302
        $region82: #{tpu_custom_call.1} parent=75 // pred_check_branch
          %2572 = sbr.rel (%p2570) target = $region84
        $region83: #{tpu_custom_call.1} parent=75 // pred_region
          %s2573 = sand.u32 %s287, 1
          %s2574 = scalar_lea.sflag [#allocation7], %s2573
          %s2575 = sand.u32 %s287, 1
          %s2576 = smul.addr %s2575, 256
          %s2577 = scalar_lea.vmem [#allocation6], %s2576
          %2578 = dma.done %s2574, 4096
        $region84: #{tpu_custom_call.1} parent=75 // pred_fallthru
          _
      $region76: #{tpu_custom_call.1} parent=5 // pred_fallthru
        _
    $region6: #{tpu_custom_call.1} parent=1 // loop_footer
      %s31 = sadd.s32 1, %s27
    $region7: #{tpu_custom_call.1} parent=1 // loop_footer_branch
      %26 = sbr.rel target = $region3
    $region8: #{tpu_custom_call.1} parent=1 // loop_exit
      _
    %2579 = vsyncpa [#allocation3], 1
    %s2580 = scalar_lea.sflag [#allocation3], 1
    %2581 = vsyncpa %s2580, 1
    %2582 = vsyncpa [#allocation4], 1
    %s2583 = scalar_lea.sflag [#allocation4], 1
    %2584 = vsyncpa %s2583, 1
    %2585 = vsyncpa [#allocation7], 1
    %s2586 = scalar_lea.sflag [#allocation7], 1
    %2587 = vsyncpa %s2586, 1

</llo_original>
